<compile_context>
chip_gen: v7x
topology: tpu7x:2x2x1
jax: 0.10.0
libtpu: 0.0.40
codegen_flags: <defaults>
</compile_context>

<pallas_src>
import math

import jax
import jax.numpy as jnp
from jax import lax
from jax.experimental import pallas as pl
from jax.experimental.pallas import tpu as pltpu


def _round_up(a: int, b: int) -> int:
    return (a + b - 1) // b * b


def _pos_enc_kernel(x_ref, w_ref, pe_ref, o_ref):
    # x_ref : VMEM (1, C, TS)  input tile (channels x flattened spatial)
    # w_ref : VMEM (C, C)      conv1x1 weight (out-channel major)
    # pe_ref: VMEM (C, TS)     positional encoding, pre-tiled to the spatial tile
    # o_ref : VMEM (1, C, TS)
    x = x_ref[0].astype(jnp.float32)                     # (C, TS)
    w = w_ref[...].astype(jnp.float32)                   # (C, C)
    # Channel-mixing 1x1x1 conv == one small matmul on the MXU, lane-dense output.
    y = jnp.dot(w, x,
                preferred_element_type=jnp.float32,
                precision=lax.Precision.HIGHEST)         # (C, TS)
    y = y + pe_ref[...].astype(jnp.float32)              # add pe[c, s mod W]
    o_ref[0] = y.astype(o_ref.dtype)


def positional_encoding(x, conv_w, pe, *, spatial_tile=32768):
    """Fused Conv3d(C,C,k=1,bias=False) + sinusoidal-PE add (dropout = identity).

    x:       (N, C, D, H, W)    float32
    conv_w:  (C, C, 1, 1, 1)    Conv3d weight, no bias
    pe:      (C, W)             pe[:C].squeeze() from the PyTorch buffer (W == d_model)
    returns  (N, C, D, H, W)
    """
    N, C, D, H, W = x.shape
    S = D * H * W
    w2d = conv_w.reshape(C, C).astype(jnp.float32)

    # Lane-dense spatial tile: multiple of 128 (vreg lanes) and of W (pe period).
    unit = 128 * W // math.gcd(128, W)
    ts = min(_round_up(spatial_tile, unit), _round_up(S, unit))
    ts = max(ts, unit)

    x_flat = x.reshape(N, C, S)                # free reshape of contiguous dims
    pad = (-S) % ts
    if pad:                                    # ragged tail only; not hit in demo
        x_flat = jnp.pad(x_flat, ((0, 0), (0, 0), (0, pad)))
    Sp = S + pad

    # pe tiled to one spatial tile: pe_tile[c, t] == pe[c, t % W]  (ts % W == 0)
    pe_tile = jnp.tile(pe.astype(jnp.float32), (1, ts // W))      # (C, ts)

    out_flat = pl.pallas_call(
        _pos_enc_kernel,
        out_shape=jax.ShapeDtypeStruct((N, C, Sp), x.dtype),
        grid=(N, Sp // ts),
        in_specs=[
            pl.BlockSpec((1, C, ts), lambda n, s: (n, 0, s)),     # x tile
            pl.BlockSpec((C, C), lambda n, s: (0, 0)),            # conv weight
            pl.BlockSpec((C, ts), lambda n, s: (0, 0)),           # tiled pe
        ],
        out_specs=pl.BlockSpec((1, C, ts), lambda n, s: (n, 0, s)),
        compiler_params=pltpu.CompilerParams(
            dimension_semantics=("parallel", "parallel")),
    )(x_flat, w2d, pe_tile)

    if pad:
        out_flat = out_flat[:, :, :S]
    return out_flat.reshape(N, C, D, H, W)


def positional_encoding_ref(x, conv_w, pe):
    """Pure-JAX reference mirroring the PyTorch forward (eval mode)."""
    N, C, D, H, W = x.shape
    w2d = conv_w.reshape(C, C)
    y = jnp.einsum("oc,ncdhw->nodhw", w2d, x,
                   precision=lax.Precision.HIGHEST)
    return y + pe[None, :, None, None, :]


if __name__ == "__main__":
    # Module implies x = (N, 12, spatial, spatial, d_model=8); real shape is
    # (1, 12, 495, 436, 8) -- use a small but shape-consistent config.
    N, C, D, H, W = 2, 12, 8, 16, 8
    d_model = W
    max_len = 5000

    key = jax.random.PRNGKey(0)
    k1, k2 = jax.random.split(key)
    x = jax.random.normal(k1, (N, C, D, H, W), jnp.float32)
    conv_w = 0.1 * jax.random.normal(k2, (C, C, 1, 1, 1), jnp.float32)

    # Sinusoidal pe buffer exactly as in the PyTorch __init__, then pe[:12].squeeze()
    position = jnp.arange(max_len, dtype=jnp.float32)[:, None]
    div_term = jnp.exp(jnp.arange(0, d_model, 2, dtype=jnp.float32)
                       * (-math.log(10000.0) / d_model))
    pe_full = jnp.zeros((max_len, d_model), jnp.float32)
    pe_full = pe_full.at[:, 0::2].set(jnp.sin(position * div_term))
    pe_full = pe_full.at[:, 1::2].set(jnp.cos(position * div_term))
    pe = pe_full[:C]                                   # (C, d_model)

    out = positional_encoding(x, conv_w, pe)
    out = jax.block_until_ready(out)

    ref = positional_encoding_ref(x, conv_w, pe)
    assert out.shape == ref.shape == (N, C, D, H, W)
    max_err = float(jnp.max(jnp.abs(out - ref)))
    assert max_err < 5e-3, f"max abs error too large: {max_err}"
    print("KERNEL_OK")
</pallas_src>

<mosaic_0001>
module attributes {stable_mosaic.version = 11 : i64} {
  func.func @_pos_enc_kernel(%arg0: i32, %arg1: i32, %arg2: memref<1x12x1024xf32, #tpu.memory_space<vmem>>, %arg3: memref<12x12xf32, #tpu.memory_space<vmem>>, %arg4: memref<12x1024xf32, #tpu.memory_space<vmem>>, %arg5: memref<1x12x1024xf32, #tpu.memory_space<vmem>>) attributes {dimension_semantics = [#tpu.dimension_semantics<parallel>, #tpu.dimension_semantics<parallel>], iteration_bounds = array<i64: 2, 1>, scalar_prefetch = 0 : i64, scratch_operands = 0 : i64, tpu.core_type = #tpu.core_type<tc>, window_params = [{transform_indices = @transform_0, window_bounds = array<i64: 1, 12, 1024>}, {pipeline_mode = #tpu.pipeline_mode<synchronous>, transform_indices = @transform_1, window_bounds = array<i64: 12, 12>}, {pipeline_mode = #tpu.pipeline_mode<synchronous>, transform_indices = @transform_2, window_bounds = array<i64: 12, 1024>}, {transform_indices = @transform_3, window_bounds = array<i64: 1, 12, 1024>}]} {
    %c0 = arith.constant 0 : index
    %c0_0 = arith.constant 0 : index
    %c0_1 = arith.constant 0 : index
    %0 = vector.load %arg2[%c0, %c0_0, %c0_1] : memref<1x12x1024xf32, #tpu.memory_space<vmem>>, vector<1x12x1024xf32>
    %1 = vector.shape_cast %0 : vector<1x12x1024xf32> to vector<12x1024xf32>
    %c0_2 = arith.constant 0 : index
    %c0_3 = arith.constant 0 : index
    %2 = vector.load %arg3[%c0_2, %c0_3] : memref<12x12xf32, #tpu.memory_space<vmem>>, vector<12x12xf32>
    %cst = arith.constant dense<0.000000e+00> : vector<12x1024xf32>
    %3 = tpu.matmul %2, %1, %cst {dimension_numbers = #tpu.dot_dimension_numbers<[1], [0], [0], [1], [0, 0, 1, 1], [], []>, precision = #tpu.contract_precision<fp32>} : vector<12x12xf32>, vector<12x1024xf32>, vector<12x1024xf32> -> vector<12x1024xf32>
    %c0_4 = arith.constant 0 : index
    %c0_5 = arith.constant 0 : index
    %4 = vector.load %arg4[%c0_4, %c0_5] : memref<12x1024xf32, #tpu.memory_space<vmem>>, vector<12x1024xf32>
    %5 = arith.addf %3, %4 : vector<12x1024xf32>
    %c0_6 = arith.constant 0 : index
    %c0_7 = arith.constant 0 : index
    %c0_8 = arith.constant 0 : index
    %6 = vector.load %arg5[%c0_6, %c0_7, %c0_8] : memref<1x12x1024xf32, #tpu.memory_space<vmem>>, vector<1x12x1024xf32>
    %7 = vector.shape_cast %6 : vector<1x12x1024xf32> to vector<12x1024xf32>
    %8 = vector.shape_cast %5 : vector<12x1024xf32> to vector<1x12x1024xf32>
    tpu.vector_store %arg5[%c0_6, %c0_7, %c0_8], %8 {strides = array<i32>} : memref<1x12x1024xf32, #tpu.memory_space<vmem>>, vector<1x12x1024xf32>,
    return
  }
  func.func @transform_0(%arg0: i32, %arg1: i32) -> (i32, i32, i32) {
    %c0_i32 = arith.constant 0 : i32
    %c0_i32_0 = arith.constant 0 : i32
    return %arg0, %c0_i32, %arg1 : i32, i32, i32
  }
  func.func @transform_1(%arg0: i32, %arg1: i32) -> (i32, i32) {
    %c0_i32 = arith.constant 0 : i32
    %c0_i32_0 = arith.constant 0 : i32
    %c0_i32_1 = arith.constant 0 : i32
    return %c0_i32, %c0_i32_0 : i32, i32
  }
  func.func @transform_2(%arg0: i32, %arg1: i32) -> (i32, i32) {
    %c0_i32 = arith.constant 0 : i32
    %c0_i32_0 = arith.constant 0 : i32
    %c0_i32_1 = arith.constant 0 : i32
    return %c0_i32, %c0_i32_0 : i32, i32
  }
  func.func @transform_3(%arg0: i32, %arg1: i32) -> (i32, i32, i32) {
    %c0_i32 = arith.constant 0 : i32
    %c0_i32_0 = arith.constant 0 : i32
    return %arg0, %c0_i32, %arg1 : i32, i32, i32
  }
}

</mosaic_0001>

<llo_original>
// kernel: tpu_custom_call.1
$region0: #{tpu_custom_call.1}
  #allocation0 [shape = 'u32[]', space=smem, size = 0x4, offset = 0x4, fixed_abs, tag = 'smem constant byte address 0x4 - core index']
  #allocation1 [shape = 'u32[144,128]{1,0:T(1,128)}', space=vmem, size = 0x12000, scoped, tag = 'internal scratch']
  %s0 = inlined_call_operand.vmem [shape: f32[2,12,1024], index: 0, kind: input, shape index: {}]
  %s1 = inlined_call_operand.vmem [shape: f32[12,12], index: 1, kind: input, shape index: {}]
  %s2 = inlined_call_operand.vmem [shape: f32[12,1024], index: 2, kind: input, shape index: {}]
  %s3 = inlined_call_operand.vmem [shape: f32[2,12,1024], index: 3, kind: output, shape index: {}]
  %s4 = sld [smem:[#allocation0]]
  $region45: #{tpu_custom_call.1} parent=0
    _
  %s6 = ssub.s32 1, %s4
  %s7 = scalar_select 0, %s6, %s4
  loop: start=0, step=1, limit=4
  $region2: #{tpu_custom_call.1} parent=0 // loop_pre_header
    _
  $region3: #{tpu_custom_call.1} parent=0 // loop_header
    %s9 = sphi 0, %s13
    %p10 = scmp.ge.s32.totalorder %s9, 4
    %s16 = sphi 0, %s28
    %s17 = sphi 0, %s24
    %s18 = sphi 0, %s16
    %s19 = sphi 0, %s17
    %s20 = sphi 0, %s18
    %s21 = sphi 0, %s19
    %s33 = sphi 0, %s35
    %s36 = sphi 0, %s33
    %s37 = sphi 0, %s36
    %s53 = sphi 0, %s37
    %s57 = sphi 0, %s57
    %s59 = sphi 0, %s57
    %s60 = sphi 0, %s59
    %s74 = sphi 0, %s60
    %s78 = sphi 0, %s78
    %s80 = sphi 0, %s78
    %s81 = sphi 0, %s80
    %s95 = sphi 0, %s81
    %s103 = sphi 0, %s105
    %s106 = sphi 0, %s103
    %s107 = sphi 0, %s106
    %s123 = sphi 0, %s107
  $region4: #{tpu_custom_call.1} parent=0 // loop_header_branch
    %12 = sbr.rel (%p10) target = $region8
  $region5: #{tpu_custom_call.1} parent=0 // loop_body
    %s14 = ssub.s32 %s9, 1
    %s15 = ssub.s32 %s9, 2
    %s22 = sadd.s32 1, %s17
    %p23 = scmp.ge.s32.totalorder %s22, 1
    %s24 = scalar_select %p23, 0, %s22
    %s25 = sadd.s32 1, %s16
    %s26 = scalar_select %p23, %s25, %s16
    %p27 = scmp.ge.s32.totalorder %s26, 2
    %s28 = scalar_select %p27, 0, %s26
    %s29 = ssub.s32 %s16, %s28
    %s30 = ssub.s32 %s17, %s24
    %s31 = sor.u32 %s29, %s30
    %p32 = scmp.eq.s32.totalorder %s31, 0
    %s34 = sadd.s32 %s33, 1
    %s35 = scalar_select %p32, %s33, %s34
    %p38 = pneg %p32
    %p39 = scmp.eq.s32.totalorder %s9, 1
    %p40 = por %p38, %p39
    %p41 = scmp.ne.s32.totalorder %s33, %s36
    %p42 = scmp.eq.s32.totalorder %s9, 0
    %p43 = por %p41, %p42
    %p44 = scmp.ne.s32.totalorder %s33, %s36
    %p45 = scmp.eq.s32.totalorder %s14, 1
    %p46 = por %p44, %p45
    %p47 = scmp.ne.s32.totalorder %s36, %s37
    %p48 = scmp.eq.s32.totalorder %s14, 0
    %p49 = por %p47, %p48
    %p50 = scmp.ne.s32.totalorder %s36, %s37
    %p51 = scmp.eq.s32.totalorder %s15, 1
    %p52 = por %p50, %p51
    %p54 = scmp.ne.s32.totalorder %s37, %s53
    %p55 = scmp.eq.s32.totalorder %s15, 0
    %p56 = por %p54, %p55
    %s58 = sadd.s32 %s57, 1
    %p61 = scmp.eq.s32.totalorder %s9, 1
    %p62 = scmp.ne.s32.totalorder %s57, %s59
    %p63 = scmp.eq.s32.totalorder %s9, 0
    %p64 = por %p62, %p63
    %p65 = scmp.ne.s32.totalorder %s57, %s59
    %p66 = scmp.eq.s32.totalorder %s14, 1
    %p67 = por %p65, %p66
    %p68 = scmp.ne.s32.totalorder %s59, %s60
    %p69 = scmp.eq.s32.totalorder %s14, 0
    %p70 = por %p68, %p69
    %p71 = scmp.ne.s32.totalorder %s59, %s60
    %p72 = scmp.eq.s32.totalorder %s15, 1
    %p73 = por %p71, %p72
    %p75 = scmp.ne.s32.totalorder %s60, %s74
    %p76 = scmp.eq.s32.totalorder %s15, 0
    %p77 = por %p75, %p76
    %s79 = sadd.s32 %s78, 1
    %p82 = scmp.eq.s32.totalorder %s9, 1
    %p83 = scmp.ne.s32.totalorder %s78, %s80
    %p84 = scmp.eq.s32.totalorder %s9, 0
    %p85 = por %p83, %p84
    %p86 = scmp.ne.s32.totalorder %s78, %s80
    %p87 = scmp.eq.s32.totalorder %s14, 1
    %p88 = por %p86, %p87
    %p89 = scmp.ne.s32.totalorder %s80, %s81
    %p90 = scmp.eq.s32.totalorder %s14, 0
    %p91 = por %p89, %p90
    %p92 = scmp.ne.s32.totalorder %s80, %s81
    %p93 = scmp.eq.s32.totalorder %s15, 1
    %p94 = por %p92, %p93
    %p96 = scmp.ne.s32.totalorder %s81, %s95
    %p97 = scmp.eq.s32.totalorder %s15, 0
    %p98 = por %p96, %p97
    %s99 = ssub.s32 %s16, %s28
    %s100 = ssub.s32 %s17, %s24
    %s101 = sor.u32 %s99, %s100
    %p102 = scmp.eq.s32.totalorder %s101, 0
    %s104 = sadd.s32 %s103, 1
    %s105 = scalar_select %p102, %s103, %s104
    %p108 = pneg %p102
    %p109 = scmp.eq.s32.totalorder %s9, 1
    %p110 = por %p108, %p109
    %p111 = scmp.ne.s32.totalorder %s103, %s106
    %p112 = scmp.eq.s32.totalorder %s9, 0
    %p113 = por %p111, %p112
    %p114 = scmp.ne.s32.totalorder %s103, %s106
    %p115 = scmp.eq.s32.totalorder %s14, 1
    %p116 = por %p114, %p115
    %p117 = scmp.ne.s32.totalorder %s106, %s107
    %p118 = scmp.eq.s32.totalorder %s14, 0
    %p119 = por %p117, %p118
    %p120 = scmp.ne.s32.totalorder %s106, %s107
    %p121 = scmp.eq.s32.totalorder %s15, 1
    %p122 = por %p120, %p121
    %p124 = scmp.ne.s32.totalorder %s107, %s123
    %p125 = scmp.eq.s32.totalorder %s15, 0
    %p126 = por %p124, %p125
    %p127 = scmp.le.s32.totalorder 1, %s9
    %p128 = scmp.lt.s32.totalorder %s9, 3
    %p129 = pnand %p127, %p128
    %p130 = pneg %p129
    // Predicated region
    $region9: #{tpu_custom_call.1} parent=5 // pred_check
      _
    $region10: #{tpu_custom_call.1} parent=5 // pred_check_branch
      %132 = sbr.rel (%p129) target = $region12
    $region11: #{tpu_custom_call.1} parent=5 // pred_region
      %s133 = ssub.s32 %s9, 1
      // Predicated region
      $region13: #{tpu_custom_call.1} parent=11 // pred_check
        %p134 = pneg %p70
      $region14: #{tpu_custom_call.1} parent=11 // pred_check_branch
        %136 = sbr.rel (%p134) target = $region16
      $region15: #{tpu_custom_call.1} parent=11 // pred_region
        _
      $region16: #{tpu_custom_call.1} parent=11 // pred_fallthru
        _
      // Predicated region
      $region17: #{tpu_custom_call.1} parent=11 // pred_check
        %p137 = pneg %p91
      $region18: #{tpu_custom_call.1} parent=11 // pred_check_branch
        %139 = sbr.rel (%p137) target = $region20
      $region19: #{tpu_custom_call.1} parent=11 // pred_region
        _
      $region20: #{tpu_custom_call.1} parent=11 // pred_fallthru
        _
    $region12: #{tpu_custom_call.1} parent=5 // pred_fallthru
      _
    %p140 = scmp.lt.s32.totalorder %s9, 2
    // Predicated region
    $region21: #{tpu_custom_call.1} parent=5 // pred_check
      %p141 = pneg %p140
    $region22: #{tpu_custom_call.1} parent=5 // pred_check_branch
      %143 = sbr.rel (%p141) target = $region24
    $region23: #{tpu_custom_call.1} parent=5 // pred_region
      // Predicated region
      $region25: #{tpu_custom_call.1} parent=23 // pred_check
        %p144 = pneg %p43
      $region26: #{tpu_custom_call.1} parent=23 // pred_check_branch
        %146 = sbr.rel (%p144) target = $region28
      $region27: #{tpu_custom_call.1} parent=23 // pred_region
        %s147 = smul.u32 8, %s17
        %p148 = scmp.lt.s32.totalorder %s16, 1
        %s149 = scalar_select %p148, %s16, 1
        %p150 = scmp.lt.s32.totalorder %s147, 7
        %s151 = scalar_select %p150, %s147, 7
        %s152 = smul.addr %s149, 16
        %s153 = sadd.s32 %s151, %s152
        %s154 = smul.addr %s153, 8
        %s155 = scalar_lea.vmem %s0, %s154
        %s156 = smul.u32 8, %s17
      $region28: #{tpu_custom_call.1} parent=23 // pred_fallthru
        _
    $region24: #{tpu_custom_call.1} parent=5 // pred_fallthru
      _
    %p157 = scmp.le.s32.totalorder 1, %s9
    %p158 = scmp.lt.s32.totalorder %s9, 3
    %p159 = pnand %p157, %p158
    %p160 = pneg %p159
    // Predicated region
    $region29: #{tpu_custom_call.1} parent=5 // pred_check
      _
    $region30: #{tpu_custom_call.1} parent=5 // pred_check_branch
      %162 = sbr.rel (%p159) target = $region32
    $region31: #{tpu_custom_call.1} parent=5 // pred_region
      %s163 = ssub.s32 %s9, 1
      %s164 = smul.u32 8, %s19
      %p165 = scmp.lt.s32.totalorder %s18, 1
      %s166 = scalar_select %p165, %s18, 1
      %p167 = scmp.lt.s32.totalorder %s164, 7
      %s168 = scalar_select %p167, %s164, 7
      %s169 = smul.addr %s166, 16
      %s170 = sadd.s32 %s168, %s169
      %s171 = smul.addr %s170, 8
      %s172 = scalar_lea.vmem %s0, %s171
      %p173 = pneg %p49
      %p174 = pneg %p46
      %p175 = pneg %p70
      %p176 = pneg %p67
      %p177 = pneg %p91
      %p178 = pneg %p88
      %p179 = pneg %p119
      %p180 = pneg %p116
      %s181 = smul.u32 8, %s19
      %p182 = scmp.lt.s32.totalorder %s18, 1
      %s183 = scalar_select %p182, %s18, 1
      %p184 = scmp.lt.s32.totalorder %s181, 7
      %s185 = scalar_select %p184, %s181, 7
      %s186 = smul.addr %s183, 16
      %s187 = sadd.s32 %s185, %s186
      %s188 = smul.addr %s187, 8
      %s189 = scalar_lea.vmem %s3, %s188
      %s190 = smul.u32 8, %s19
      %p191 = scmp.lt.s32.totalorder %s18, 1
      %s192 = scalar_select %p191, %s18, 1
      %p193 = scmp.lt.s32.totalorder %s190, 7
      %s194 = scalar_select %p193, %s190, 7
      %s195 = smul.addr %s192, 16
      %s196 = sadd.s32 %s194, %s195
      %s197 = smul.addr %s196, 8
      %s198 = scalar_lea.vmem %s0, %s197
      %s199 = smul.u32 8, %s19
      %s200 = smul.u32 8, %s19
      %p201 = scmp.lt.s32.totalorder %s18, 1
      %s202 = scalar_select %p201, %s18, 1
      %p203 = scmp.lt.s32.totalorder %s200, 7
      %s204 = scalar_select %p203, %s200, 7
      %s205 = smul.addr %s202, 16
      %s206 = sadd.s32 %s204, %s205
      %s207 = smul.addr %s206, 8
      %s208 = scalar_lea.vmem %s3, %s207
      %s209 = smul.u32 8, %s19
      %v210 = vld [vmem:[%s198] sm:$0xff]
      %v211 = vld [vmem:[%s198 + $0x8] sm:$0xff]
      %v212 = vld [vmem:[%s198 + $0x10] sm:$0xff]
      %v213 = vld [vmem:[%s198 + $0x18] sm:$0xff]
      %v214 = vld [vmem:[%s198 + $0x20] sm:$0xff]
      %v215 = vld [vmem:[%s198 + $0x28] sm:$0xff]
      %v216 = vld [vmem:[%s198 + $0x30] sm:$0xff]
      %v217 = vld [vmem:[%s198 + $0x38] sm:$0xff]
      %v218 = vld [vmem:[%s198 + $0x40] sm:$0xf]
      %v219 = vld [vmem:[%s198 + $0x48] sm:$0xf]
      %v220 = vld [vmem:[%s198 + $0x50] sm:$0xf]
      %v221 = vld [vmem:[%s198 + $0x58] sm:$0xf]
      %v222 = vld [vmem:[%s198 + $0x60] sm:$0xf]
      %v223 = vld [vmem:[%s198 + $0x68] sm:$0xf]
      %v224 = vld [vmem:[%s198 + $0x70] sm:$0xf]
      %v225 = vld [vmem:[%s198 + $0x78] sm:$0xf]
      %v226 = vld [vmem:[%s1] sm:$0xff]
      %v227 = vld [vmem:[%s1 + $0x8] sm:$0xf]
      %v228 = vld [vmem:[%s2] sm:$0xff]
      %v229 = vld [vmem:[%s2 + $0x8] sm:$0xff]
      %v230 = vld [vmem:[%s2 + $0x10] sm:$0xff]
      %v231 = vld [vmem:[%s2 + $0x18] sm:$0xff]
      %v232 = vld [vmem:[%s2 + $0x20] sm:$0xff]
      %v233 = vld [vmem:[%s2 + $0x28] sm:$0xff]
      %v234 = vld [vmem:[%s2 + $0x30] sm:$0xff]
      %v235 = vld [vmem:[%s2 + $0x38] sm:$0xff]
      %v236 = vld [vmem:[%s2 + $0x40] sm:$0xf]
      %v237 = vld [vmem:[%s2 + $0x48] sm:$0xf]
      %v238 = vld [vmem:[%s2 + $0x50] sm:$0xf]
      %v239 = vld [vmem:[%s2 + $0x58] sm:$0xf]
      %v240 = vld [vmem:[%s2 + $0x60] sm:$0xf]
      %v241 = vld [vmem:[%s2 + $0x68] sm:$0xf]
      %v242 = vld [vmem:[%s2 + $0x70] sm:$0xf]
      %v243 = vld [vmem:[%s2 + $0x78] sm:$0xf]
      %vm244 = vcmask 97280
      %v246 = vsel %vm244, %v226, 0
      %v249 = vsel %vm244, %v227, 0
      %vm251 = vcmask 1043456
      %v253 = vsel %vm251, %v218, 0
      %v256 = vsel %vm251, %v219, 0
      %v259 = vsel %vm251, %v220, 0
      %v262 = vsel %vm251, %v221, 0
      %v265 = vsel %vm251, %v222, 0
      %v268 = vsel %vm251, %v223, 0
      %v271 = vsel %vm251, %v224, 0
      %v274 = vsel %vm251, %v225, 0
      %v276 = vand.u32 %v211, 4294901760
      %277 = vmatprep.subr.mxu0 %v276
      %v278 = vand.u32 %v210, 4294901760
      %279 = vmatpush1.msra.mxu0 %v278
      %v280 = vand.u32 %v256, 4294901760
      %281 = vmatprep.subr.mxu0 %v280
      %v282 = vand.u32 %v253, 4294901760
      %283 = vmatpush1.msra.mxu0 %v282
      %284 = vmatprep.subr.mxu0 0.0
      %285 = vmatpush1.msra.mxu0 0.0
      %286 = vmatprep.subr.mxu0 0.0
      %287 = vmatpush1.msra.mxu0 0.0
      %288 = vmatprep.subr.mxu0 0.0
      %289 = vmatpush1.msra.mxu0 0.0
      %290 = vmatprep.subr.mxu0 0.0
      %291 = vmatpush1.msra.mxu0 0.0
      %292 = vmatprep.subr.mxu0 0.0
      %293 = vmatpush1.msra.mxu0 0.0
      %294 = vmatprep.subr.mxu0 0.0
      %295 = vmatpush1.msra.mxu0 0.0
      %296 = vmatprep.subr.mxu0 0.0
      %297 = vmatpush1.msra.mxu0 0.0
      %298 = vmatprep.subr.mxu0 0.0
      %299 = vmatpush1.msra.mxu0 0.0
      %300 = vmatprep.subr.mxu0 0.0
      %301 = vmatpush1.msra.mxu0 0.0
      %302 = vmatprep.subr.mxu0 0.0
      %303 = vmatpush1.msra.mxu0 0.0
      %304 = vmatprep.subr.mxu0 0.0
      %305 = vmatpush1.msra.mxu0 0.0
      %306 = vmatprep.subr.mxu0 0.0
      %307 = vmatpush1.msra.mxu0 0.0
      %308 = vmatprep.subr.mxu0 0.0
      %309 = vmatpush1.msra.mxu0 0.0
      %310 = vmatprep.subr.mxu0 0.0
      %311 = vmatpush1.msra.mxu0 0.0
      %312 = vmatprep.subr.mxu0 0.0
      %313 = vmatpush1.msra.mxu0 0.0
      %314 = vmatprep.subr.mxu0 0.0
      %315 = vmatpush1.msra.mxu0 0.0
      %316 = vmatprep.subr.mxu0 0.0
      %317 = vmatpush1.msra.mxu0 0.0
      %318 = vmatprep.subr.mxu0 0.0
      %319 = vmatpush1.msra.mxu0 0.0
      %320 = vmatprep.subr.mxu0 0.0
      %321 = vmatpush1.msra.mxu0 0.0
      %322 = vmatprep.subr.mxu0 0.0
      %323 = vmatpush1.msra.mxu0 0.0
      %324 = vmatprep.subr.mxu0 0.0
      %325 = vmatpush1.msra.mxu0 0.0
      %326 = vmatprep.subr.mxu0 0.0
      %327 = vmatpush1.msra.mxu0 0.0
      %328 = vmatprep.subr.mxu0 0.0
      %329 = vmatpush1.msra.mxu0 0.0
      %330 = vmatprep.subr.mxu0 0.0
      %331 = vmatpush1.msra.mxu0 0.0
      %332 = vmatprep.subr.mxu0 0.0
      %333 = vmatpush1.msra.mxu0 0.0
      %334 = vmatprep.subr.mxu0 0.0
      %335 = vmatpush1.msra.mxu0 0.0
      %336 = vmatprep.subr.mxu0 0.0
      %337 = vmatpush1.msra.mxu0 0.0
      %338 = vmatprep.subr.mxu0 0.0
      %339 = vmatpush1.msra.mxu0 0.0
      %340 = vmatprep.subr.mxu0 0.0
      %341 = vmatpush1.msra.mxu0 0.0
      %342 = vmatprep.subr.mxu0 0.0
      %343 = vmatpush1.msra.mxu0 0.0
      %344 = vmatprep.mubr.f32.mxu0 0.0
      %v345 = vand.u32 %v246, 4294901760
      %v346 = vsub.f32 %v246, %v345
      %v347 = vand.u32 %v346, 4294901760
      %v348 = vsub.f32 %v346, %v347
      %v349 = vand.u32 %v348, 4294901760
      %350 = vmatmul.mubr.f32.gmra.mrb[0].mxu0 %v349
      %v351 = vpop.f32.mrb[0].mxu0
      %v352 = vadd.f32 %v228, %v351
      %v353 = vpop.f32.mrb[0].mxu0
      %v354 = vadd.f32 %v229, %v353
      %355 = vmatprep.mubr.f32.mxu0 0.0
      %v356 = vand.u32 %v249, 4294901760
      %v357 = vsub.f32 %v249, %v356
      %v358 = vand.u32 %v357, 4294901760
      %v359 = vsub.f32 %v357, %v358
      %v360 = vand.u32 %v359, 4294901760
      %361 = vmatmul.mubr.f32.gmra.mrb[0].mxu0 %v360
      %v362 = vpop.f32.mrb[0].mxu0
      %v363 = vadd.f32 %v236, %v362
      %v364 = vpop.f32.mrb[0].mxu0
      %v365 = vadd.f32 %v237, %v364
      %366 = vdwg.mxu0
      %v367 = vand.u32 %v211, 4294901760
      %v368 = vsub.f32 %v211, %v367
      %v369 = vand.u32 %v368, 4294901760
      %v370 = vsub.f32 %v368, %v369
      %v371 = vand.u32 %v370, 4294901760
      %372 = vmatprep.subr.mxu0 %v371
      %v373 = vand.u32 %v210, 4294901760
      %v374 = vsub.f32 %v210, %v373
      %v375 = vand.u32 %v374, 4294901760
      %v376 = vsub.f32 %v374, %v375
      %v377 = vand.u32 %v376, 4294901760
      %378 = vmatpush1.msra.mxu0 %v377
      %v379 = vand.u32 %v256, 4294901760
      %v380 = vsub.f32 %v256, %v379
      %v381 = vand.u32 %v380, 4294901760
      %v382 = vsub.f32 %v380, %v381
      %v383 = vand.u32 %v382, 4294901760
      %384 = vmatprep.subr.mxu0 %v383
      %v385 = vand.u32 %v253, 4294901760
      %v386 = vsub.f32 %v253, %v385
      %v387 = vand.u32 %v386, 4294901760
      %v388 = vsub.f32 %v386, %v387
      %v389 = vand.u32 %v388, 4294901760
      %390 = vmatpush1.msra.mxu0 %v389
      %391 = vmatprep.subr.mxu0 0.0
      %392 = vmatpush1.msra.mxu0 0.0
      %393 = vmatprep.subr.mxu0 0.0
      %394 = vmatpush1.msra.mxu0 0.0
      %395 = vmatprep.subr.mxu0 0.0
      %396 = vmatpush1.msra.mxu0 0.0
      %397 = vmatprep.subr.mxu0 0.0
      %398 = vmatpush1.msra.mxu0 0.0
      %399 = vmatprep.subr.mxu0 0.0
      %400 = vmatpush1.msra.mxu0 0.0
      %401 = vmatprep.subr.mxu0 0.0
      %402 = vmatpush1.msra.mxu0 0.0
      %403 = vmatprep.subr.mxu0 0.0
      %404 = vmatpush1.msra.mxu0 0.0
      %405 = vmatprep.subr.mxu0 0.0
      %406 = vmatpush1.msra.mxu0 0.0
      %407 = vmatprep.subr.mxu0 0.0
      %408 = vmatpush1.msra.mxu0 0.0
      %409 = vmatprep.subr.mxu0 0.0
      %410 = vmatpush1.msra.mxu0 0.0
      %411 = vmatprep.subr.mxu0 0.0
      %412 = vmatpush1.msra.mxu0 0.0
      %413 = vmatprep.subr.mxu0 0.0
      %414 = vmatpush1.msra.mxu0 0.0
      %415 = vmatprep.subr.mxu0 0.0
      %416 = vmatpush1.msra.mxu0 0.0
      %417 = vmatprep.subr.mxu0 0.0
      %418 = vmatpush1.msra.mxu0 0.0
      %419 = vmatprep.subr.mxu0 0.0
      %420 = vmatpush1.msra.mxu0 0.0
      %421 = vmatprep.subr.mxu0 0.0
      %422 = vmatpush1.msra.mxu0 0.0
      %423 = vmatprep.subr.mxu0 0.0
      %424 = vmatpush1.msra.mxu0 0.0
      %425 = vmatprep.subr.mxu0 0.0
      %426 = vmatpush1.msra.mxu0 0.0
      %427 = vmatprep.subr.mxu0 0.0
      %428 = vmatpush1.msra.mxu0 0.0
      %429 = vmatprep.subr.mxu0 0.0
      %430 = vmatpush1.msra.mxu0 0.0
      %431 = vmatprep.subr.mxu0 0.0
      %432 = vmatpush1.msra.mxu0 0.0
      %433 = vmatprep.subr.mxu0 0.0
      %434 = vmatpush1.msra.mxu0 0.0
      %435 = vmatprep.subr.mxu0 0.0
      %436 = vmatpush1.msra.mxu0 0.0
      %437 = vmatprep.subr.mxu0 0.0
      %438 = vmatpush1.msra.mxu0 0.0
      %439 = vmatprep.subr.mxu0 0.0
      %440 = vmatpush1.msra.mxu0 0.0
      %441 = vmatprep.subr.mxu0 0.0
      %442 = vmatpush1.msra.mxu0 0.0
      %443 = vmatprep.subr.mxu0 0.0
      %444 = vmatpush1.msra.mxu0 0.0
      %445 = vmatprep.subr.mxu0 0.0
      %446 = vmatpush1.msra.mxu0 0.0
      %447 = vmatprep.subr.mxu0 0.0
      %448 = vmatpush1.msra.mxu0 0.0
      %449 = vmatprep.subr.mxu0 0.0
      %450 = vmatpush1.msra.mxu0 0.0
      %451 = vmatprep.mubr.f32.mxu0 0.0
      %v452 = vand.u32 %v246, 4294901760
      %453 = vmatmul.mubr.f32.gmra.mrb[0].mxu0 %v452
      %v454 = vpop.f32.mrb[0].mxu0
      %v455 = vadd.f32 %v352, %v454
      %v456 = vpop.f32.mrb[0].mxu0
      %v457 = vadd.f32 %v354, %v456
      %458 = vmatprep.mubr.f32.mxu0 0.0
      %v459 = vand.u32 %v249, 4294901760
      %460 = vmatmul.mubr.f32.gmra.mrb[0].mxu0 %v459
      %v461 = vpop.f32.mrb[0].mxu0
      %v462 = vadd.f32 %v363, %v461
      %v463 = vpop.f32.mrb[0].mxu0
      %v464 = vadd.f32 %v365, %v463
      %465 = vdwg.mxu0
      %v466 = vand.u32 %v211, 4294901760
      %v467 = vsub.f32 %v211, %v466
      %468 = vmatprep.subr.mxu0 %v467
      %v469 = vand.u32 %v210, 4294901760
      %v470 = vsub.f32 %v210, %v469
      %471 = vmatpush1.msra.mxu0 %v470
      %v472 = vand.u32 %v256, 4294901760
      %v473 = vsub.f32 %v256, %v472
      %474 = vmatprep.subr.mxu0 %v473
      %v475 = vand.u32 %v253, 4294901760
      %v476 = vsub.f32 %v253, %v475
      %477 = vmatpush1.msra.mxu0 %v476
      %478 = vmatprep.subr.mxu0 0.0
      %479 = vmatpush1.msra.mxu0 0.0
      %480 = vmatprep.subr.mxu0 0.0
      %481 = vmatpush1.msra.mxu0 0.0
      %482 = vmatprep.subr.mxu0 0.0
      %483 = vmatpush1.msra.mxu0 0.0
      %484 = vmatprep.subr.mxu0 0.0
      %485 = vmatpush1.msra.mxu0 0.0
      %486 = vmatprep.subr.mxu0 0.0
      %487 = vmatpush1.msra.mxu0 0.0
      %488 = vmatprep.subr.mxu0 0.0
      %489 = vmatpush1.msra.mxu0 0.0
      %490 = vmatprep.subr.mxu0 0.0
      %491 = vmatpush1.msra.mxu0 0.0
      %492 = vmatprep.subr.mxu0 0.0
      %493 = vmatpush1.msra.mxu0 0.0
      %494 = vmatprep.subr.mxu0 0.0
      %495 = vmatpush1.msra.mxu0 0.0
      %496 = vmatprep.subr.mxu0 0.0
      %497 = vmatpush1.msra.mxu0 0.0
      %498 = vmatprep.subr.mxu0 0.0
      %499 = vmatpush1.msra.mxu0 0.0
      %500 = vmatprep.subr.mxu0 0.0
      %501 = vmatpush1.msra.mxu0 0.0
      %502 = vmatprep.subr.mxu0 0.0
      %503 = vmatpush1.msra.mxu0 0.0
      %504 = vmatprep.subr.mxu0 0.0
      %505 = vmatpush1.msra.mxu0 0.0
      %506 = vmatprep.subr.mxu0 0.0
      %507 = vmatpush1.msra.mxu0 0.0
      %508 = vmatprep.subr.mxu0 0.0
      %509 = vmatpush1.msra.mxu0 0.0
      %510 = vmatprep.subr.mxu0 0.0
      %511 = vmatpush1.msra.mxu0 0.0
      %512 = vmatprep.subr.mxu0 0.0
      %513 = vmatpush1.msra.mxu0 0.0
      %514 = vmatprep.subr.mxu0 0.0
      %515 = vmatpush1.msra.mxu0 0.0
      %516 = vmatprep.subr.mxu0 0.0
      %517 = vmatpush1.msra.mxu0 0.0
      %518 = vmatprep.subr.mxu0 0.0
      %519 = vmatpush1.msra.mxu0 0.0
      %520 = vmatprep.subr.mxu0 0.0
      %521 = vmatpush1.msra.mxu0 0.0
      %522 = vmatprep.subr.mxu0 0.0
      %523 = vmatpush1.msra.mxu0 0.0
      %524 = vmatprep.subr.mxu0 0.0
      %525 = vmatpush1.msra.mxu0 0.0
      %526 = vmatprep.subr.mxu0 0.0
      %527 = vmatpush1.msra.mxu0 0.0
      %528 = vmatprep.subr.mxu0 0.0
      %529 = vmatpush1.msra.mxu0 0.0
      %530 = vmatprep.subr.mxu0 0.0
      %531 = vmatpush1.msra.mxu0 0.0
      %532 = vmatprep.subr.mxu0 0.0
      %533 = vmatpush1.msra.mxu0 0.0
      %534 = vmatprep.subr.mxu0 0.0
      %535 = vmatpush1.msra.mxu0 0.0
      %536 = vmatprep.subr.mxu0 0.0
      %537 = vmatpush1.msra.mxu0 0.0
      %538 = vmatprep.mubr.f32.mxu0 0.0
      %v539 = vand.u32 %v246, 4294901760
      %v540 = vsub.f32 %v246, %v539
      %541 = vmatmul.mubr.f32.gmra.mrb[0].mxu0 %v540
      %v542 = vpop.f32.mrb[0].mxu0
      %v543 = vadd.f32 %v455, %v542
      %v544 = vpop.f32.mrb[0].mxu0
      %v545 = vadd.f32 %v457, %v544
      %546 = vmatprep.mubr.f32.mxu0 0.0
      %v547 = vand.u32 %v249, 4294901760
      %v548 = vsub.f32 %v249, %v547
      %549 = vmatmul.mubr.f32.gmra.mrb[0].mxu0 %v548
      %v550 = vpop.f32.mrb[0].mxu0
      %v551 = vadd.f32 %v462, %v550
      %v552 = vpop.f32.mrb[0].mxu0
      %v553 = vadd.f32 %v464, %v552
      %554 = vdwg.mxu0
      %v555 = vand.u32 %v211, 4294901760
      %556 = vmatprep.subr.mxu0 %v555
      %v557 = vand.u32 %v210, 4294901760
      %558 = vmatpush1.msra.mxu0 %v557
      %v559 = vand.u32 %v256, 4294901760
      %560 = vmatprep.subr.mxu0 %v559
      %v561 = vand.u32 %v253, 4294901760
      %562 = vmatpush1.msra.mxu0 %v561
      %563 = vmatprep.subr.mxu0 0.0
      %564 = vmatpush1.msra.mxu0 0.0
      %565 = vmatprep.subr.mxu0 0.0
      %566 = vmatpush1.msra.mxu0 0.0
      %567 = vmatprep.subr.mxu0 0.0
      %568 = vmatpush1.msra.mxu0 0.0
      %569 = vmatprep.subr.mxu0 0.0
      %570 = vmatpush1.msra.mxu0 0.0
      %571 = vmatprep.subr.mxu0 0.0
      %572 = vmatpush1.msra.mxu0 0.0
      %573 = vmatprep.subr.mxu0 0.0
      %574 = vmatpush1.msra.mxu0 0.0
      %575 = vmatprep.subr.mxu0 0.0
      %576 = vmatpush1.msra.mxu0 0.0
      %577 = vmatprep.subr.mxu0 0.0
      %578 = vmatpush1.msra.mxu0 0.0
      %579 = vmatprep.subr.mxu0 0.0
      %580 = vmatpush1.msra.mxu0 0.0
      %581 = vmatprep.subr.mxu0 0.0
      %582 = vmatpush1.msra.mxu0 0.0
      %583 = vmatprep.subr.mxu0 0.0
      %584 = vmatpush1.msra.mxu0 0.0
      %585 = vmatprep.subr.mxu0 0.0
      %586 = vmatpush1.msra.mxu0 0.0
      %587 = vmatprep.subr.mxu0 0.0
      %588 = vmatpush1.msra.mxu0 0.0
      %589 = vmatprep.subr.mxu0 0.0
      %590 = vmatpush1.msra.mxu0 0.0
      %591 = vmatprep.subr.mxu0 0.0
      %592 = vmatpush1.msra.mxu0 0.0
      %593 = vmatprep.subr.mxu0 0.0
      %594 = vmatpush1.msra.mxu0 0.0
      %595 = vmatprep.subr.mxu0 0.0
      %596 = vmatpush1.msra.mxu0 0.0
      %597 = vmatprep.subr.mxu0 0.0
      %598 = vmatpush1.msra.mxu0 0.0
      %599 = vmatprep.subr.mxu0 0.0
      %600 = vmatpush1.msra.mxu0 0.0
      %601 = vmatprep.subr.mxu0 0.0
      %602 = vmatpush1.msra.mxu0 0.0
      %603 = vmatprep.subr.mxu0 0.0
      %604 = vmatpush1.msra.mxu0 0.0
      %605 = vmatprep.subr.mxu0 0.0
      %606 = vmatpush1.msra.mxu0 0.0
      %607 = vmatprep.subr.mxu0 0.0
      %608 = vmatpush1.msra.mxu0 0.0
      %609 = vmatprep.subr.mxu0 0.0
      %610 = vmatpush1.msra.mxu0 0.0
      %611 = vmatprep.subr.mxu0 0.0
      %612 = vmatpush1.msra.mxu0 0.0
      %613 = vmatprep.subr.mxu0 0.0
      %614 = vmatpush1.msra.mxu0 0.0
      %615 = vmatprep.subr.mxu0 0.0
      %616 = vmatpush1.msra.mxu0 0.0
      %617 = vmatprep.subr.mxu0 0.0
      %618 = vmatpush1.msra.mxu0 0.0
      %619 = vmatprep.subr.mxu0 0.0
      %620 = vmatpush1.msra.mxu0 0.0
      %621 = vmatprep.subr.mxu0 0.0
      %622 = vmatpush1.msra.mxu0 0.0
      %623 = vmatprep.mubr.f32.mxu0 0.0
      %v624 = vand.u32 %v246, 4294901760
      %v625 = vsub.f32 %v246, %v624
      %v626 = vand.u32 %v625, 4294901760
      %627 = vmatmul.mubr.f32.gmra.mrb[0].mxu0 %v626
      %v628 = vpop.f32.mrb[0].mxu0
      %v629 = vadd.f32 %v543, %v628
      %v630 = vpop.f32.mrb[0].mxu0
      %v631 = vadd.f32 %v545, %v630
      %632 = vmatprep.mubr.f32.mxu0 0.0
      %v633 = vand.u32 %v249, 4294901760
      %v634 = vsub.f32 %v249, %v633
      %v635 = vand.u32 %v634, 4294901760
      %636 = vmatmul.mubr.f32.gmra.mrb[0].mxu0 %v635
      %v637 = vpop.f32.mrb[0].mxu0
      %v638 = vadd.f32 %v551, %v637
      %v639 = vpop.f32.mrb[0].mxu0
      %v640 = vadd.f32 %v553, %v639
      %641 = vdwg.mxu0
      %v642 = vand.u32 %v211, 4294901760
      %v643 = vsub.f32 %v211, %v642
      %v644 = vand.u32 %v643, 4294901760
      %645 = vmatprep.subr.mxu0 %v644
      %v646 = vand.u32 %v210, 4294901760
      %v647 = vsub.f32 %v210, %v646
      %v648 = vand.u32 %v647, 4294901760
      %649 = vmatpush1.msra.mxu0 %v648
      %v650 = vand.u32 %v256, 4294901760
      %v651 = vsub.f32 %v256, %v650
      %v652 = vand.u32 %v651, 4294901760
      %653 = vmatprep.subr.mxu0 %v652
      %v654 = vand.u32 %v253, 4294901760
      %v655 = vsub.f32 %v253, %v654
      %v656 = vand.u32 %v655, 4294901760
      %657 = vmatpush1.msra.mxu0 %v656
      %658 = vmatprep.subr.mxu0 0.0
      %659 = vmatpush1.msra.mxu0 0.0
      %660 = vmatprep.subr.mxu0 0.0
      %661 = vmatpush1.msra.mxu0 0.0
      %662 = vmatprep.subr.mxu0 0.0
      %663 = vmatpush1.msra.mxu0 0.0
      %664 = vmatprep.subr.mxu0 0.0
      %665 = vmatpush1.msra.mxu0 0.0
      %666 = vmatprep.subr.mxu0 0.0
      %667 = vmatpush1.msra.mxu0 0.0
      %668 = vmatprep.subr.mxu0 0.0
      %669 = vmatpush1.msra.mxu0 0.0
      %670 = vmatprep.subr.mxu0 0.0
      %671 = vmatpush1.msra.mxu0 0.0
      %672 = vmatprep.subr.mxu0 0.0
      %673 = vmatpush1.msra.mxu0 0.0
      %674 = vmatprep.subr.mxu0 0.0
      %675 = vmatpush1.msra.mxu0 0.0
      %676 = vmatprep.subr.mxu0 0.0
      %677 = vmatpush1.msra.mxu0 0.0
      %678 = vmatprep.subr.mxu0 0.0
      %679 = vmatpush1.msra.mxu0 0.0
      %680 = vmatprep.subr.mxu0 0.0
      %681 = vmatpush1.msra.mxu0 0.0
      %682 = vmatprep.subr.mxu0 0.0
      %683 = vmatpush1.msra.mxu0 0.0
      %684 = vmatprep.subr.mxu0 0.0
      %685 = vmatpush1.msra.mxu0 0.0
      %686 = vmatprep.subr.mxu0 0.0
      %687 = vmatpush1.msra.mxu0 0.0
      %688 = vmatprep.subr.mxu0 0.0
      %689 = vmatpush1.msra.mxu0 0.0
      %690 = vmatprep.subr.mxu0 0.0
      %691 = vmatpush1.msra.mxu0 0.0
      %692 = vmatprep.subr.mxu0 0.0
      %693 = vmatpush1.msra.mxu0 0.0
      %694 = vmatprep.subr.mxu0 0.0
      %695 = vmatpush1.msra.mxu0 0.0
      %696 = vmatprep.subr.mxu0 0.0
      %697 = vmatpush1.msra.mxu0 0.0
      %698 = vmatprep.subr.mxu0 0.0
      %699 = vmatpush1.msra.mxu0 0.0
      %700 = vmatprep.subr.mxu0 0.0
      %701 = vmatpush1.msra.mxu0 0.0
      %702 = vmatprep.subr.mxu0 0.0
      %703 = vmatpush1.msra.mxu0 0.0
      %704 = vmatprep.subr.mxu0 0.0
      %705 = vmatpush1.msra.mxu0 0.0
      %706 = vmatprep.subr.mxu0 0.0
      %707 = vmatpush1.msra.mxu0 0.0
      %708 = vmatprep.subr.mxu0 0.0
      %709 = vmatpush1.msra.mxu0 0.0
      %710 = vmatprep.subr.mxu0 0.0
      %711 = vmatpush1.msra.mxu0 0.0
      %712 = vmatprep.subr.mxu0 0.0
      %713 = vmatpush1.msra.mxu0 0.0
      %714 = vmatprep.subr.mxu0 0.0
      %715 = vmatpush1.msra.mxu0 0.0
      %716 = vmatprep.subr.mxu0 0.0
      %717 = vmatpush1.msra.mxu0 0.0
      %718 = vmatprep.mubr.f32.mxu0 0.0
      %v719 = vand.u32 %v246, 4294901760
      %720 = vmatmul.mubr.f32.gmra.mrb[0].mxu0 %v719
      %v721 = vpop.f32.mrb[0].mxu0
      %v722 = vadd.f32 %v629, %v721
      %v723 = vpop.f32.mrb[0].mxu0
      %v724 = vadd.f32 %v631, %v723
      %725 = vmatprep.mubr.f32.mxu0 0.0
      %v726 = vand.u32 %v249, 4294901760
      %727 = vmatmul.mubr.f32.gmra.mrb[0].mxu0 %v726
      %v728 = vpop.f32.mrb[0].mxu0
      %v729 = vadd.f32 %v638, %v728
      %v730 = vpop.f32.mrb[0].mxu0
      %v731 = vadd.f32 %v640, %v730
      %732 = vdwg.mxu0
      %v733 = vand.u32 %v211, 4294901760
      %734 = vmatprep.subr.mxu0 %v733
      %v735 = vand.u32 %v210, 4294901760
      %736 = vmatpush1.msra.mxu0 %v735
      %v737 = vand.u32 %v256, 4294901760
      %738 = vmatprep.subr.mxu0 %v737
      %v739 = vand.u32 %v253, 4294901760
      %740 = vmatpush1.msra.mxu0 %v739
      %741 = vmatprep.subr.mxu0 0.0
      %742 = vmatpush1.msra.mxu0 0.0
      %743 = vmatprep.subr.mxu0 0.0
      %744 = vmatpush1.msra.mxu0 0.0
      %745 = vmatprep.subr.mxu0 0.0
      %746 = vmatpush1.msra.mxu0 0.0
      %747 = vmatprep.subr.mxu0 0.0
      %748 = vmatpush1.msra.mxu0 0.0
      %749 = vmatprep.subr.mxu0 0.0
      %750 = vmatpush1.msra.mxu0 0.0
      %751 = vmatprep.subr.mxu0 0.0
      %752 = vmatpush1.msra.mxu0 0.0
      %753 = vmatprep.subr.mxu0 0.0
      %754 = vmatpush1.msra.mxu0 0.0
      %755 = vmatprep.subr.mxu0 0.0
      %756 = vmatpush1.msra.mxu0 0.0
      %757 = vmatprep.subr.mxu0 0.0
      %758 = vmatpush1.msra.mxu0 0.0
      %759 = vmatprep.subr.mxu0 0.0
      %760 = vmatpush1.msra.mxu0 0.0
      %761 = vmatprep.subr.mxu0 0.0
      %762 = vmatpush1.msra.mxu0 0.0
      %763 = vmatprep.subr.mxu0 0.0
      %764 = vmatpush1.msra.mxu0 0.0
      %765 = vmatprep.subr.mxu0 0.0
      %766 = vmatpush1.msra.mxu0 0.0
      %767 = vmatprep.subr.mxu0 0.0
      %768 = vmatpush1.msra.mxu0 0.0
      %769 = vmatprep.subr.mxu0 0.0
      %770 = vmatpush1.msra.mxu0 0.0
      %771 = vmatprep.subr.mxu0 0.0
      %772 = vmatpush1.msra.mxu0 0.0
      %773 = vmatprep.subr.mxu0 0.0
      %774 = vmatpush1.msra.mxu0 0.0
      %775 = vmatprep.subr.mxu0 0.0
      %776 = vmatpush1.msra.mxu0 0.0
      %777 = vmatprep.subr.mxu0 0.0
      %778 = vmatpush1.msra.mxu0 0.0
      %779 = vmatprep.subr.mxu0 0.0
      %780 = vmatpush1.msra.mxu0 0.0
      %781 = vmatprep.subr.mxu0 0.0
      %782 = vmatpush1.msra.mxu0 0.0
      %783 = vmatprep.subr.mxu0 0.0
      %784 = vmatpush1.msra.mxu0 0.0
      %785 = vmatprep.subr.mxu0 0.0
      %786 = vmatpush1.msra.mxu0 0.0
      %787 = vmatprep.subr.mxu0 0.0
      %788 = vmatpush1.msra.mxu0 0.0
      %789 = vmatprep.subr.mxu0 0.0
      %790 = vmatpush1.msra.mxu0 0.0
      %791 = vmatprep.subr.mxu0 0.0
      %792 = vmatpush1.msra.mxu0 0.0
      %793 = vmatprep.subr.mxu0 0.0
      %794 = vmatpush1.msra.mxu0 0.0
      %795 = vmatprep.subr.mxu0 0.0
      %796 = vmatpush1.msra.mxu0 0.0
      %797 = vmatprep.subr.mxu0 0.0
      %798 = vmatpush1.msra.mxu0 0.0
      %799 = vmatprep.subr.mxu0 0.0
      %800 = vmatpush1.msra.mxu0 0.0
      %801 = vmatprep.mubr.f32.mxu0 0.0
      %v802 = vand.u32 %v246, 4294901760
      %803 = vmatmul.mubr.f32.gmra.mrb[0].mxu0 %v802
      %v804 = vpop.f32.mrb[0].mxu0
      %v805 = vadd.f32 %v722, %v804
      %v806 = vpop.f32.mrb[0].mxu0
      %v807 = vadd.f32 %v724, %v806
      %808 = vmatprep.mubr.f32.mxu0 0.0
      %v809 = vand.u32 %v249, 4294901760
      %810 = vmatmul.mubr.f32.gmra.mrb[0].mxu0 %v809
      %v811 = vpop.f32.mrb[0].mxu0
      %v812 = vadd.f32 %v729, %v811
      %v813 = vpop.f32.mrb[0].mxu0
      %v814 = vadd.f32 %v731, %v813
      %815 = vdwg.mxu0
      %v816 = vand.u32 %v213, 4294901760
      %817 = vmatprep.subr.mxu0 %v816
      %v818 = vand.u32 %v212, 4294901760
      %819 = vmatpush1.msra.mxu0 %v818
      %v820 = vand.u32 %v262, 4294901760
      %821 = vmatprep.subr.mxu0 %v820
      %v822 = vand.u32 %v259, 4294901760
      %823 = vmatpush1.msra.mxu0 %v822
      %824 = vmatprep.subr.mxu0 0.0
      %825 = vmatpush1.msra.mxu0 0.0
      %826 = vmatprep.subr.mxu0 0.0
      %827 = vmatpush1.msra.mxu0 0.0
      %828 = vmatprep.subr.mxu0 0.0
      %829 = vmatpush1.msra.mxu0 0.0
      %830 = vmatprep.subr.mxu0 0.0
      %831 = vmatpush1.msra.mxu0 0.0
      %832 = vmatprep.subr.mxu0 0.0
      %833 = vmatpush1.msra.mxu0 0.0
      %834 = vmatprep.subr.mxu0 0.0
      %835 = vmatpush1.msra.mxu0 0.0
      %836 = vmatprep.subr.mxu0 0.0
      %837 = vmatpush1.msra.mxu0 0.0
      %838 = vmatprep.subr.mxu0 0.0
      %839 = vmatpush1.msra.mxu0 0.0
      %840 = vmatprep.subr.mxu0 0.0
      %841 = vmatpush1.msra.mxu0 0.0
      %842 = vmatprep.subr.mxu0 0.0
      %843 = vmatpush1.msra.mxu0 0.0
      %844 = vmatprep.subr.mxu0 0.0
      %845 = vmatpush1.msra.mxu0 0.0
      %846 = vmatprep.subr.mxu0 0.0
      %847 = vmatpush1.msra.mxu0 0.0
      %848 = vmatprep.subr.mxu0 0.0
      %849 = vmatpush1.msra.mxu0 0.0
      %850 = vmatprep.subr.mxu0 0.0
      %851 = vmatpush1.msra.mxu0 0.0
      %852 = vmatprep.subr.mxu0 0.0
      %853 = vmatpush1.msra.mxu0 0.0
      %854 = vmatprep.subr.mxu0 0.0
      %855 = vmatpush1.msra.mxu0 0.0
      %856 = vmatprep.subr.mxu0 0.0
      %857 = vmatpush1.msra.mxu0 0.0
      %858 = vmatprep.subr.mxu0 0.0
      %859 = vmatpush1.msra.mxu0 0.0
      %860 = vmatprep.subr.mxu0 0.0
      %861 = vmatpush1.msra.mxu0 0.0
      %862 = vmatprep.subr.mxu0 0.0
      %863 = vmatpush1.msra.mxu0 0.0
      %864 = vmatprep.subr.mxu0 0.0
      %865 = vmatpush1.msra.mxu0 0.0
      %866 = vmatprep.subr.mxu0 0.0
      %867 = vmatpush1.msra.mxu0 0.0
      %868 = vmatprep.subr.mxu0 0.0
      %869 = vmatpush1.msra.mxu0 0.0
      %870 = vmatprep.subr.mxu0 0.0
      %871 = vmatpush1.msra.mxu0 0.0
      %872 = vmatprep.subr.mxu0 0.0
      %873 = vmatpush1.msra.mxu0 0.0
      %874 = vmatprep.subr.mxu0 0.0
      %875 = vmatpush1.msra.mxu0 0.0
      %876 = vmatprep.subr.mxu0 0.0
      %877 = vmatpush1.msra.mxu0 0.0
      %878 = vmatprep.subr.mxu0 0.0
      %879 = vmatpush1.msra.mxu0 0.0
      %880 = vmatprep.subr.mxu0 0.0
      %881 = vmatpush1.msra.mxu0 0.0
      %882 = vmatprep.subr.mxu0 0.0
      %883 = vmatpush1.msra.mxu0 0.0
      %884 = vmatprep.mubr.f32.mxu0 0.0
      %v885 = vand.u32 %v246, 4294901760
      %v886 = vsub.f32 %v246, %v885
      %v887 = vand.u32 %v886, 4294901760
      %v888 = vsub.f32 %v886, %v887
      %v889 = vand.u32 %v888, 4294901760
      %890 = vmatmul.mubr.f32.gmra.mrb[0].mxu0 %v889
      %v891 = vpop.f32.mrb[0].mxu0
      %v892 = vadd.f32 %v230, %v891
      %v893 = vpop.f32.mrb[0].mxu0
      %v894 = vadd.f32 %v231, %v893
      %895 = vmatprep.mubr.f32.mxu0 0.0
      %v896 = vand.u32 %v249, 4294901760
      %v897 = vsub.f32 %v249, %v896
      %v898 = vand.u32 %v897, 4294901760
      %v899 = vsub.f32 %v897, %v898
      %v900 = vand.u32 %v899, 4294901760
      %901 = vmatmul.mubr.f32.gmra.mrb[0].mxu0 %v900
      %v902 = vpop.f32.mrb[0].mxu0
      %v903 = vadd.f32 %v238, %v902
      %v904 = vpop.f32.mrb[0].mxu0
      %v905 = vadd.f32 %v239, %v904
      %906 = vdwg.mxu0
      %v907 = vand.u32 %v213, 4294901760
      %v908 = vsub.f32 %v213, %v907
      %v909 = vand.u32 %v908, 4294901760
      %v910 = vsub.f32 %v908, %v909
      %v911 = vand.u32 %v910, 4294901760
      %912 = vmatprep.subr.mxu0 %v911
      %v913 = vand.u32 %v212, 4294901760
      %v914 = vsub.f32 %v212, %v913
      %v915 = vand.u32 %v914, 4294901760
      %v916 = vsub.f32 %v914, %v915
      %v917 = vand.u32 %v916, 4294901760
      %918 = vmatpush1.msra.mxu0 %v917
      %v919 = vand.u32 %v262, 4294901760
      %v920 = vsub.f32 %v262, %v919
      %v921 = vand.u32 %v920, 4294901760
      %v922 = vsub.f32 %v920, %v921
      %v923 = vand.u32 %v922, 4294901760
      %924 = vmatprep.subr.mxu0 %v923
      %v925 = vand.u32 %v259, 4294901760
      %v926 = vsub.f32 %v259, %v925
      %v927 = vand.u32 %v926, 4294901760
      %v928 = vsub.f32 %v926, %v927
      %v929 = vand.u32 %v928, 4294901760
      %930 = vmatpush1.msra.mxu0 %v929
      %931 = vmatprep.subr.mxu0 0.0
      %932 = vmatpush1.msra.mxu0 0.0
      %933 = vmatprep.subr.mxu0 0.0
      %934 = vmatpush1.msra.mxu0 0.0
      %935 = vmatprep.subr.mxu0 0.0
      %936 = vmatpush1.msra.mxu0 0.0
      %937 = vmatprep.subr.mxu0 0.0
      %938 = vmatpush1.msra.mxu0 0.0
      %939 = vmatprep.subr.mxu0 0.0
      %940 = vmatpush1.msra.mxu0 0.0
      %941 = vmatprep.subr.mxu0 0.0
      %942 = vmatpush1.msra.mxu0 0.0
      %943 = vmatprep.subr.mxu0 0.0
      %944 = vmatpush1.msra.mxu0 0.0
      %945 = vmatprep.subr.mxu0 0.0
      %946 = vmatpush1.msra.mxu0 0.0
      %947 = vmatprep.subr.mxu0 0.0
      %948 = vmatpush1.msra.mxu0 0.0
      %949 = vmatprep.subr.mxu0 0.0
      %950 = vmatpush1.msra.mxu0 0.0
      %951 = vmatprep.subr.mxu0 0.0
      %952 = vmatpush1.msra.mxu0 0.0
      %953 = vmatprep.subr.mxu0 0.0
      %954 = vmatpush1.msra.mxu0 0.0
      %955 = vmatprep.subr.mxu0 0.0
      %956 = vmatpush1.msra.mxu0 0.0
      %957 = vmatprep.subr.mxu0 0.0
      %958 = vmatpush1.msra.mxu0 0.0
      %959 = vmatprep.subr.mxu0 0.0
      %960 = vmatpush1.msra.mxu0 0.0
      %961 = vmatprep.subr.mxu0 0.0
      %962 = vmatpush1.msra.mxu0 0.0
      %963 = vmatprep.subr.mxu0 0.0
      %964 = vmatpush1.msra.mxu0 0.0
      %965 = vmatprep.subr.mxu0 0.0
      %966 = vmatpush1.msra.mxu0 0.0
      %967 = vmatprep.subr.mxu0 0.0
      %968 = vmatpush1.msra.mxu0 0.0
      %969 = vmatprep.subr.mxu0 0.0
      %970 = vmatpush1.msra.mxu0 0.0
      %971 = vmatprep.subr.mxu0 0.0
      %972 = vmatpush1.msra.mxu0 0.0
      %973 = vmatprep.subr.mxu0 0.0
      %974 = vmatpush1.msra.mxu0 0.0
      %975 = vmatprep.subr.mxu0 0.0
      %976 = vmatpush1.msra.mxu0 0.0
      %977 = vmatprep.subr.mxu0 0.0
      %978 = vmatpush1.msra.mxu0 0.0
      %979 = vmatprep.subr.mxu0 0.0
      %980 = vmatpush1.msra.mxu0 0.0
      %981 = vmatprep.subr.mxu0 0.0
      %982 = vmatpush1.msra.mxu0 0.0
      %983 = vmatprep.subr.mxu0 0.0
      %984 = vmatpush1.msra.mxu0 0.0
      %985 = vmatprep.subr.mxu0 0.0
      %986 = vmatpush1.msra.mxu0 0.0
      %987 = vmatprep.subr.mxu0 0.0
      %988 = vmatpush1.msra.mxu0 0.0
      %989 = vmatprep.subr.mxu0 0.0
      %990 = vmatpush1.msra.mxu0 0.0
      %991 = vmatprep.mubr.f32.mxu0 0.0
      %v992 = vand.u32 %v246, 4294901760
      %993 = vmatmul.mubr.f32.gmra.mrb[0].mxu0 %v992
      %v994 = vpop.f32.mrb[0].mxu0
      %v995 = vadd.f32 %v892, %v994
      %v996 = vpop.f32.mrb[0].mxu0
      %v997 = vadd.f32 %v894, %v996
      %998 = vmatprep.mubr.f32.mxu0 0.0
      %v999 = vand.u32 %v249, 4294901760
      %1000 = vmatmul.mubr.f32.gmra.mrb[0].mxu0 %v999
      %v1001 = vpop.f32.mrb[0].mxu0
      %v1002 = vadd.f32 %v903, %v1001
      %v1003 = vpop.f32.mrb[0].mxu0
      %v1004 = vadd.f32 %v905, %v1003
      %1005 = vdwg.mxu0
      %v1006 = vand.u32 %v213, 4294901760
      %v1007 = vsub.f32 %v213, %v1006
      %1008 = vmatprep.subr.mxu0 %v1007
      %v1009 = vand.u32 %v212, 4294901760
      %v1010 = vsub.f32 %v212, %v1009
      %1011 = vmatpush1.msra.mxu0 %v1010
      %v1012 = vand.u32 %v262, 4294901760
      %v1013 = vsub.f32 %v262, %v1012
      %1014 = vmatprep.subr.mxu0 %v1013
      %v1015 = vand.u32 %v259, 4294901760
      %v1016 = vsub.f32 %v259, %v1015
      %1017 = vmatpush1.msra.mxu0 %v1016
      %1018 = vmatprep.subr.mxu0 0.0
      %1019 = vmatpush1.msra.mxu0 0.0
      %1020 = vmatprep.subr.mxu0 0.0
      %1021 = vmatpush1.msra.mxu0 0.0
      %1022 = vmatprep.subr.mxu0 0.0
      %1023 = vmatpush1.msra.mxu0 0.0
      %1024 = vmatprep.subr.mxu0 0.0
      %1025 = vmatpush1.msra.mxu0 0.0
      %1026 = vmatprep.subr.mxu0 0.0
      %1027 = vmatpush1.msra.mxu0 0.0
      %1028 = vmatprep.subr.mxu0 0.0
      %1029 = vmatpush1.msra.mxu0 0.0
      %1030 = vmatprep.subr.mxu0 0.0
      %1031 = vmatpush1.msra.mxu0 0.0
      %1032 = vmatprep.subr.mxu0 0.0
      %1033 = vmatpush1.msra.mxu0 0.0
      %1034 = vmatprep.subr.mxu0 0.0
      %1035 = vmatpush1.msra.mxu0 0.0
      %1036 = vmatprep.subr.mxu0 0.0
      %1037 = vmatpush1.msra.mxu0 0.0
      %1038 = vmatprep.subr.mxu0 0.0
      %1039 = vmatpush1.msra.mxu0 0.0
      %1040 = vmatprep.subr.mxu0 0.0
      %1041 = vmatpush1.msra.mxu0 0.0
      %1042 = vmatprep.subr.mxu0 0.0
      %1043 = vmatpush1.msra.mxu0 0.0
      %1044 = vmatprep.subr.mxu0 0.0
      %1045 = vmatpush1.msra.mxu0 0.0
      %1046 = vmatprep.subr.mxu0 0.0
      %1047 = vmatpush1.msra.mxu0 0.0
      %1048 = vmatprep.subr.mxu0 0.0
      %1049 = vmatpush1.msra.mxu0 0.0
      %1050 = vmatprep.subr.mxu0 0.0
      %1051 = vmatpush1.msra.mxu0 0.0
      %1052 = vmatprep.subr.mxu0 0.0
      %1053 = vmatpush1.msra.mxu0 0.0
      %1054 = vmatprep.subr.mxu0 0.0
      %1055 = vmatpush1.msra.mxu0 0.0
      %1056 = vmatprep.subr.mxu0 0.0
      %1057 = vmatpush1.msra.mxu0 0.0
      %1058 = vmatprep.subr.mxu0 0.0
      %1059 = vmatpush1.msra.mxu0 0.0
      %1060 = vmatprep.subr.mxu0 0.0
      %1061 = vmatpush1.msra.mxu0 0.0
      %1062 = vmatprep.subr.mxu0 0.0
      %1063 = vmatpush1.msra.mxu0 0.0
      %1064 = vmatprep.subr.mxu0 0.0
      %1065 = vmatpush1.msra.mxu0 0.0
      %1066 = vmatprep.subr.mxu0 0.0
      %1067 = vmatpush1.msra.mxu0 0.0
      %1068 = vmatprep.subr.mxu0 0.0
      %1069 = vmatpush1.msra.mxu0 0.0
      %1070 = vmatprep.subr.mxu0 0.0
      %1071 = vmatpush1.msra.mxu0 0.0
      %1072 = vmatprep.subr.mxu0 0.0
      %1073 = vmatpush1.msra.mxu0 0.0
      %1074 = vmatprep.subr.mxu0 0.0
      %1075 = vmatpush1.msra.mxu0 0.0
      %1076 = vmatprep.subr.mxu0 0.0
      %1077 = vmatpush1.msra.mxu0 0.0
      %1078 = vmatprep.mubr.f32.mxu0 0.0
      %v1079 = vand.u32 %v246, 4294901760
      %v1080 = vsub.f32 %v246, %v1079
      %1081 = vmatmul.mubr.f32.gmra.mrb[0].mxu0 %v1080
      %v1082 = vpop.f32.mrb[0].mxu0
      %v1083 = vadd.f32 %v995, %v1082
      %v1084 = vpop.f32.mrb[0].mxu0
      %v1085 = vadd.f32 %v997, %v1084
      %1086 = vmatprep.mubr.f32.mxu0 0.0
      %v1087 = vand.u32 %v249, 4294901760
      %v1088 = vsub.f32 %v249, %v1087
      %1089 = vmatmul.mubr.f32.gmra.mrb[0].mxu0 %v1088
      %v1090 = vpop.f32.mrb[0].mxu0
      %v1091 = vadd.f32 %v1002, %v1090
      %v1092 = vpop.f32.mrb[0].mxu0
      %v1093 = vadd.f32 %v1004, %v1092
      %1094 = vdwg.mxu0
      %v1095 = vand.u32 %v213, 4294901760
      %1096 = vmatprep.subr.mxu0 %v1095
      %v1097 = vand.u32 %v212, 4294901760
      %1098 = vmatpush1.msra.mxu0 %v1097
      %v1099 = vand.u32 %v262, 4294901760
      %1100 = vmatprep.subr.mxu0 %v1099
      %v1101 = vand.u32 %v259, 4294901760
      %1102 = vmatpush1.msra.mxu0 %v1101
      %1103 = vmatprep.subr.mxu0 0.0
      %1104 = vmatpush1.msra.mxu0 0.0
      %1105 = vmatprep.subr.mxu0 0.0
      %1106 = vmatpush1.msra.mxu0 0.0
      %1107 = vmatprep.subr.mxu0 0.0
      %1108 = vmatpush1.msra.mxu0 0.0
      %1109 = vmatprep.subr.mxu0 0.0
      %1110 = vmatpush1.msra.mxu0 0.0
      %1111 = vmatprep.subr.mxu0 0.0
      %1112 = vmatpush1.msra.mxu0 0.0
      %1113 = vmatprep.subr.mxu0 0.0
      %1114 = vmatpush1.msra.mxu0 0.0
      %1115 = vmatprep.subr.mxu0 0.0
      %1116 = vmatpush1.msra.mxu0 0.0
      %1117 = vmatprep.subr.mxu0 0.0
      %1118 = vmatpush1.msra.mxu0 0.0
      %1119 = vmatprep.subr.mxu0 0.0
      %1120 = vmatpush1.msra.mxu0 0.0
      %1121 = vmatprep.subr.mxu0 0.0
      %1122 = vmatpush1.msra.mxu0 0.0
      %1123 = vmatprep.subr.mxu0 0.0
      %1124 = vmatpush1.msra.mxu0 0.0
      %1125 = vmatprep.subr.mxu0 0.0
      %1126 = vmatpush1.msra.mxu0 0.0
      %1127 = vmatprep.subr.mxu0 0.0
      %1128 = vmatpush1.msra.mxu0 0.0
      %1129 = vmatprep.subr.mxu0 0.0
      %1130 = vmatpush1.msra.mxu0 0.0
      %1131 = vmatprep.subr.mxu0 0.0
      %1132 = vmatpush1.msra.mxu0 0.0
      %1133 = vmatprep.subr.mxu0 0.0
      %1134 = vmatpush1.msra.mxu0 0.0
      %1135 = vmatprep.subr.mxu0 0.0
      %1136 = vmatpush1.msra.mxu0 0.0
      %1137 = vmatprep.subr.mxu0 0.0
      %1138 = vmatpush1.msra.mxu0 0.0
      %1139 = vmatprep.subr.mxu0 0.0
      %1140 = vmatpush1.msra.mxu0 0.0
      %1141 = vmatprep.subr.mxu0 0.0
      %1142 = vmatpush1.msra.mxu0 0.0
      %1143 = vmatprep.subr.mxu0 0.0
      %1144 = vmatpush1.msra.mxu0 0.0
      %1145 = vmatprep.subr.mxu0 0.0
      %1146 = vmatpush1.msra.mxu0 0.0
      %1147 = vmatprep.subr.mxu0 0.0
      %1148 = vmatpush1.msra.mxu0 0.0
      %1149 = vmatprep.subr.mxu0 0.0
      %1150 = vmatpush1.msra.mxu0 0.0
      %1151 = vmatprep.subr.mxu0 0.0
      %1152 = vmatpush1.msra.mxu0 0.0
      %1153 = vmatprep.subr.mxu0 0.0
      %1154 = vmatpush1.msra.mxu0 0.0
      %1155 = vmatprep.subr.mxu0 0.0
      %1156 = vmatpush1.msra.mxu0 0.0
      %1157 = vmatprep.subr.mxu0 0.0
      %1158 = vmatpush1.msra.mxu0 0.0
      %1159 = vmatprep.subr.mxu0 0.0
      %1160 = vmatpush1.msra.mxu0 0.0
      %1161 = vmatprep.subr.mxu0 0.0
      %1162 = vmatpush1.msra.mxu0 0.0
      %1163 = vmatprep.mubr.f32.mxu0 0.0
      %v1164 = vand.u32 %v246, 4294901760
      %v1165 = vsub.f32 %v246, %v1164
      %v1166 = vand.u32 %v1165, 4294901760
      %1167 = vmatmul.mubr.f32.gmra.mrb[0].mxu0 %v1166
      %v1168 = vpop.f32.mrb[0].mxu0
      %v1169 = vadd.f32 %v1083, %v1168
      %v1170 = vpop.f32.mrb[0].mxu0
      %v1171 = vadd.f32 %v1085, %v1170
      %1172 = vmatprep.mubr.f32.mxu0 0.0
      %v1173 = vand.u32 %v249, 4294901760
      %v1174 = vsub.f32 %v249, %v1173
      %v1175 = vand.u32 %v1174, 4294901760
      %1176 = vmatmul.mubr.f32.gmra.mrb[0].mxu0 %v1175
      %v1177 = vpop.f32.mrb[0].mxu0
      %v1178 = vadd.f32 %v1091, %v1177
      %v1179 = vpop.f32.mrb[0].mxu0
      %v1180 = vadd.f32 %v1093, %v1179
      %1181 = vdwg.mxu0
      %v1182 = vand.u32 %v213, 4294901760
      %v1183 = vsub.f32 %v213, %v1182
      %v1184 = vand.u32 %v1183, 4294901760
      %1185 = vmatprep.subr.mxu0 %v1184
      %v1186 = vand.u32 %v212, 4294901760
      %v1187 = vsub.f32 %v212, %v1186
      %v1188 = vand.u32 %v1187, 4294901760
      %1189 = vmatpush1.msra.mxu0 %v1188
      %v1190 = vand.u32 %v262, 4294901760
      %v1191 = vsub.f32 %v262, %v1190
      %v1192 = vand.u32 %v1191, 4294901760
      %1193 = vmatprep.subr.mxu0 %v1192
      %v1194 = vand.u32 %v259, 4294901760
      %v1195 = vsub.f32 %v259, %v1194
      %v1196 = vand.u32 %v1195, 4294901760
      %1197 = vmatpush1.msra.mxu0 %v1196
      %1198 = vmatprep.subr.mxu0 0.0
      %1199 = vmatpush1.msra.mxu0 0.0
      %1200 = vmatprep.subr.mxu0 0.0
      %1201 = vmatpush1.msra.mxu0 0.0
      %1202 = vmatprep.subr.mxu0 0.0
      %1203 = vmatpush1.msra.mxu0 0.0
      %1204 = vmatprep.subr.mxu0 0.0
      %1205 = vmatpush1.msra.mxu0 0.0
      %1206 = vmatprep.subr.mxu0 0.0
      %1207 = vmatpush1.msra.mxu0 0.0
      %1208 = vmatprep.subr.mxu0 0.0
      %1209 = vmatpush1.msra.mxu0 0.0
      %1210 = vmatprep.subr.mxu0 0.0
      %1211 = vmatpush1.msra.mxu0 0.0
      %1212 = vmatprep.subr.mxu0 0.0
      %1213 = vmatpush1.msra.mxu0 0.0
      %1214 = vmatprep.subr.mxu0 0.0
      %1215 = vmatpush1.msra.mxu0 0.0
      %1216 = vmatprep.subr.mxu0 0.0
      %1217 = vmatpush1.msra.mxu0 0.0
      %1218 = vmatprep.subr.mxu0 0.0
      %1219 = vmatpush1.msra.mxu0 0.0
      %1220 = vmatprep.subr.mxu0 0.0
      %1221 = vmatpush1.msra.mxu0 0.0
      %1222 = vmatprep.subr.mxu0 0.0
      %1223 = vmatpush1.msra.mxu0 0.0
      %1224 = vmatprep.subr.mxu0 0.0
      %1225 = vmatpush1.msra.mxu0 0.0
      %1226 = vmatprep.subr.mxu0 0.0
      %1227 = vmatpush1.msra.mxu0 0.0
      %1228 = vmatprep.subr.mxu0 0.0
      %1229 = vmatpush1.msra.mxu0 0.0
      %1230 = vmatprep.subr.mxu0 0.0
      %1231 = vmatpush1.msra.mxu0 0.0
      %1232 = vmatprep.subr.mxu0 0.0
      %1233 = vmatpush1.msra.mxu0 0.0
      %1234 = vmatprep.subr.mxu0 0.0
      %1235 = vmatpush1.msra.mxu0 0.0
      %1236 = vmatprep.subr.mxu0 0.0
      %1237 = vmatpush1.msra.mxu0 0.0
      %1238 = vmatprep.subr.mxu0 0.0
      %1239 = vmatpush1.msra.mxu0 0.0
      %1240 = vmatprep.subr.mxu0 0.0
      %1241 = vmatpush1.msra.mxu0 0.0
      %1242 = vmatprep.subr.mxu0 0.0
      %1243 = vmatpush1.msra.mxu0 0.0
      %1244 = vmatprep.subr.mxu0 0.0
      %1245 = vmatpush1.msra.mxu0 0.0
      %1246 = vmatprep.subr.mxu0 0.0
      %1247 = vmatpush1.msra.mxu0 0.0
      %1248 = vmatprep.subr.mxu0 0.0
      %1249 = vmatpush1.msra.mxu0 0.0
      %1250 = vmatprep.subr.mxu0 0.0
      %1251 = vmatpush1.msra.mxu0 0.0
      %1252 = vmatprep.subr.mxu0 0.0
      %1253 = vmatpush1.msra.mxu0 0.0
      %1254 = vmatprep.subr.mxu0 0.0
      %1255 = vmatpush1.msra.mxu0 0.0
      %1256 = vmatprep.subr.mxu0 0.0
      %1257 = vmatpush1.msra.mxu0 0.0
      %1258 = vmatprep.mubr.f32.mxu0 0.0
      %v1259 = vand.u32 %v246, 4294901760
      %1260 = vmatmul.mubr.f32.gmra.mrb[0].mxu0 %v1259
      %v1261 = vpop.f32.mrb[0].mxu0
      %v1262 = vadd.f32 %v1169, %v1261
      %v1263 = vpop.f32.mrb[0].mxu0
      %v1264 = vadd.f32 %v1171, %v1263
      %1265 = vmatprep.mubr.f32.mxu0 0.0
      %v1266 = vand.u32 %v249, 4294901760
      %1267 = vmatmul.mubr.f32.gmra.mrb[0].mxu0 %v1266
      %v1268 = vpop.f32.mrb[0].mxu0
      %v1269 = vadd.f32 %v1178, %v1268
      %v1270 = vpop.f32.mrb[0].mxu0
      %v1271 = vadd.f32 %v1180, %v1270
      %1272 = vdwg.mxu0
      %v1273 = vand.u32 %v213, 4294901760
      %1274 = vmatprep.subr.mxu0 %v1273
      %v1275 = vand.u32 %v212, 4294901760
      %1276 = vmatpush1.msra.mxu0 %v1275
      %v1277 = vand.u32 %v262, 4294901760
      %1278 = vmatprep.subr.mxu0 %v1277
      %v1279 = vand.u32 %v259, 4294901760
      %1280 = vmatpush1.msra.mxu0 %v1279
      %1281 = vmatprep.subr.mxu0 0.0
      %1282 = vmatpush1.msra.mxu0 0.0
      %1283 = vmatprep.subr.mxu0 0.0
      %1284 = vmatpush1.msra.mxu0 0.0
      %1285 = vmatprep.subr.mxu0 0.0
      %1286 = vmatpush1.msra.mxu0 0.0
      %1287 = vmatprep.subr.mxu0 0.0
      %1288 = vmatpush1.msra.mxu0 0.0
      %1289 = vmatprep.subr.mxu0 0.0
      %1290 = vmatpush1.msra.mxu0 0.0
      %1291 = vmatprep.subr.mxu0 0.0
      %1292 = vmatpush1.msra.mxu0 0.0
      %1293 = vmatprep.subr.mxu0 0.0
      %1294 = vmatpush1.msra.mxu0 0.0
      %1295 = vmatprep.subr.mxu0 0.0
      %1296 = vmatpush1.msra.mxu0 0.0
      %1297 = vmatprep.subr.mxu0 0.0
      %1298 = vmatpush1.msra.mxu0 0.0
      %1299 = vmatprep.subr.mxu0 0.0
      %1300 = vmatpush1.msra.mxu0 0.0
      %1301 = vmatprep.subr.mxu0 0.0
      %1302 = vmatpush1.msra.mxu0 0.0
      %1303 = vmatprep.subr.mxu0 0.0
      %1304 = vmatpush1.msra.mxu0 0.0
      %1305 = vmatprep.subr.mxu0 0.0
      %1306 = vmatpush1.msra.mxu0 0.0
      %1307 = vmatprep.subr.mxu0 0.0
      %1308 = vmatpush1.msra.mxu0 0.0
      %1309 = vmatprep.subr.mxu0 0.0
      %1310 = vmatpush1.msra.mxu0 0.0
      %1311 = vmatprep.subr.mxu0 0.0
      %1312 = vmatpush1.msra.mxu0 0.0
      %1313 = vmatprep.subr.mxu0 0.0
      %1314 = vmatpush1.msra.mxu0 0.0
      %1315 = vmatprep.subr.mxu0 0.0
      %1316 = vmatpush1.msra.mxu0 0.0
      %1317 = vmatprep.subr.mxu0 0.0
      %1318 = vmatpush1.msra.mxu0 0.0
      %1319 = vmatprep.subr.mxu0 0.0
      %1320 = vmatpush1.msra.mxu0 0.0
      %1321 = vmatprep.subr.mxu0 0.0
      %1322 = vmatpush1.msra.mxu0 0.0
      %1323 = vmatprep.subr.mxu0 0.0
      %1324 = vmatpush1.msra.mxu0 0.0
      %1325 = vmatprep.subr.mxu0 0.0
      %1326 = vmatpush1.msra.mxu0 0.0
      %1327 = vmatprep.subr.mxu0 0.0
      %1328 = vmatpush1.msra.mxu0 0.0
      %1329 = vmatprep.subr.mxu0 0.0
      %1330 = vmatpush1.msra.mxu0 0.0
      %1331 = vmatprep.subr.mxu0 0.0
      %1332 = vmatpush1.msra.mxu0 0.0
      %1333 = vmatprep.subr.mxu0 0.0
      %1334 = vmatpush1.msra.mxu0 0.0
      %1335 = vmatprep.subr.mxu0 0.0
      %1336 = vmatpush1.msra.mxu0 0.0
      %1337 = vmatprep.subr.mxu0 0.0
      %1338 = vmatpush1.msra.mxu0 0.0
      %1339 = vmatprep.subr.mxu0 0.0
      %1340 = vmatpush1.msra.mxu0 0.0
      %1341 = vmatprep.mubr.f32.mxu0 0.0
      %v1342 = vand.u32 %v246, 4294901760
      %1343 = vmatmul.mubr.f32.gmra.mrb[0].mxu0 %v1342
      %v1344 = vpop.f32.mrb[0].mxu0
      %v1345 = vadd.f32 %v1262, %v1344
      %v1346 = vpop.f32.mrb[0].mxu0
      %v1347 = vadd.f32 %v1264, %v1346
      %1348 = vmatprep.mubr.f32.mxu0 0.0
      %v1349 = vand.u32 %v249, 4294901760
      %1350 = vmatmul.mubr.f32.gmra.mrb[0].mxu0 %v1349
      %v1351 = vpop.f32.mrb[0].mxu0
      %v1352 = vadd.f32 %v1269, %v1351
      %v1353 = vpop.f32.mrb[0].mxu0
      %v1354 = vadd.f32 %v1271, %v1353
      %1355 = vdwg.mxu0
      %v1356 = vand.u32 %v215, 4294901760
      %1357 = vmatprep.subr.mxu0 %v1356
      %v1358 = vand.u32 %v214, 4294901760
      %1359 = vmatpush1.msra.mxu0 %v1358
      %v1360 = vand.u32 %v268, 4294901760
      %1361 = vmatprep.subr.mxu0 %v1360
      %v1362 = vand.u32 %v265, 4294901760
      %1363 = vmatpush1.msra.mxu0 %v1362
      %1364 = vmatprep.subr.mxu0 0.0
      %1365 = vmatpush1.msra.mxu0 0.0
      %1366 = vmatprep.subr.mxu0 0.0
      %1367 = vmatpush1.msra.mxu0 0.0
      %1368 = vmatprep.subr.mxu0 0.0
      %1369 = vmatpush1.msra.mxu0 0.0
      %1370 = vmatprep.subr.mxu0 0.0
      %1371 = vmatpush1.msra.mxu0 0.0
      %1372 = vmatprep.subr.mxu0 0.0
      %1373 = vmatpush1.msra.mxu0 0.0
      %1374 = vmatprep.subr.mxu0 0.0
      %1375 = vmatpush1.msra.mxu0 0.0
      %1376 = vmatprep.subr.mxu0 0.0
      %1377 = vmatpush1.msra.mxu0 0.0
      %1378 = vmatprep.subr.mxu0 0.0
      %1379 = vmatpush1.msra.mxu0 0.0
      %1380 = vmatprep.subr.mxu0 0.0
      %1381 = vmatpush1.msra.mxu0 0.0
      %1382 = vmatprep.subr.mxu0 0.0
      %1383 = vmatpush1.msra.mxu0 0.0
      %1384 = vmatprep.subr.mxu0 0.0
      %1385 = vmatpush1.msra.mxu0 0.0
      %1386 = vmatprep.subr.mxu0 0.0
      %1387 = vmatpush1.msra.mxu0 0.0
      %1388 = vmatprep.subr.mxu0 0.0
      %1389 = vmatpush1.msra.mxu0 0.0
      %1390 = vmatprep.subr.mxu0 0.0
      %1391 = vmatpush1.msra.mxu0 0.0
      %1392 = vmatprep.subr.mxu0 0.0
      %1393 = vmatpush1.msra.mxu0 0.0
      %1394 = vmatprep.subr.mxu0 0.0
      %1395 = vmatpush1.msra.mxu0 0.0
      %1396 = vmatprep.subr.mxu0 0.0
      %1397 = vmatpush1.msra.mxu0 0.0
      %1398 = vmatprep.subr.mxu0 0.0
      %1399 = vmatpush1.msra.mxu0 0.0
      %1400 = vmatprep.subr.mxu0 0.0
      %1401 = vmatpush1.msra.mxu0 0.0
      %1402 = vmatprep.subr.mxu0 0.0
      %1403 = vmatpush1.msra.mxu0 0.0
      %1404 = vmatprep.subr.mxu0 0.0
      %1405 = vmatpush1.msra.mxu0 0.0
      %1406 = vmatprep.subr.mxu0 0.0
      %1407 = vmatpush1.msra.mxu0 0.0
      %1408 = vmatprep.subr.mxu0 0.0
      %1409 = vmatpush1.msra.mxu0 0.0
      %1410 = vmatprep.subr.mxu0 0.0
      %1411 = vmatpush1.msra.mxu0 0.0
      %1412 = vmatprep.subr.mxu0 0.0
      %1413 = vmatpush1.msra.mxu0 0.0
      %1414 = vmatprep.subr.mxu0 0.0
      %1415 = vmatpush1.msra.mxu0 0.0
      %1416 = vmatprep.subr.mxu0 0.0
      %1417 = vmatpush1.msra.mxu0 0.0
      %1418 = vmatprep.subr.mxu0 0.0
      %1419 = vmatpush1.msra.mxu0 0.0
      %1420 = vmatprep.subr.mxu0 0.0
      %1421 = vmatpush1.msra.mxu0 0.0
      %1422 = vmatprep.subr.mxu0 0.0
      %1423 = vmatpush1.msra.mxu0 0.0
      %1424 = vmatprep.mubr.f32.mxu0 0.0
      %v1425 = vand.u32 %v246, 4294901760
      %v1426 = vsub.f32 %v246, %v1425
      %v1427 = vand.u32 %v1426, 4294901760
      %v1428 = vsub.f32 %v1426, %v1427
      %v1429 = vand.u32 %v1428, 4294901760
      %1430 = vmatmul.mubr.f32.gmra.mrb[0].mxu0 %v1429
      %v1431 = vpop.f32.mrb[0].mxu0
      %v1432 = vadd.f32 %v232, %v1431
      %v1433 = vpop.f32.mrb[0].mxu0
      %v1434 = vadd.f32 %v233, %v1433
      %1435 = vmatprep.mubr.f32.mxu0 0.0
      %v1436 = vand.u32 %v249, 4294901760
      %v1437 = vsub.f32 %v249, %v1436
      %v1438 = vand.u32 %v1437, 4294901760
      %v1439 = vsub.f32 %v1437, %v1438
      %v1440 = vand.u32 %v1439, 4294901760
      %1441 = vmatmul.mubr.f32.gmra.mrb[0].mxu0 %v1440
      %v1442 = vpop.f32.mrb[0].mxu0
      %v1443 = vadd.f32 %v240, %v1442
      %v1444 = vpop.f32.mrb[0].mxu0
      %v1445 = vadd.f32 %v241, %v1444
      %1446 = vdwg.mxu0
      %v1447 = vand.u32 %v215, 4294901760
      %v1448 = vsub.f32 %v215, %v1447
      %v1449 = vand.u32 %v1448, 4294901760
      %v1450 = vsub.f32 %v1448, %v1449
      %v1451 = vand.u32 %v1450, 4294901760
      %1452 = vmatprep.subr.mxu0 %v1451
      %v1453 = vand.u32 %v214, 4294901760
      %v1454 = vsub.f32 %v214, %v1453
      %v1455 = vand.u32 %v1454, 4294901760
      %v1456 = vsub.f32 %v1454, %v1455
      %v1457 = vand.u32 %v1456, 4294901760
      %1458 = vmatpush1.msra.mxu0 %v1457
      %v1459 = vand.u32 %v268, 4294901760
      %v1460 = vsub.f32 %v268, %v1459
      %v1461 = vand.u32 %v1460, 4294901760
      %v1462 = vsub.f32 %v1460, %v1461
      %v1463 = vand.u32 %v1462, 4294901760
      %1464 = vmatprep.subr.mxu0 %v1463
      %v1465 = vand.u32 %v265, 4294901760
      %v1466 = vsub.f32 %v265, %v1465
      %v1467 = vand.u32 %v1466, 4294901760
      %v1468 = vsub.f32 %v1466, %v1467
      %v1469 = vand.u32 %v1468, 4294901760
      %1470 = vmatpush1.msra.mxu0 %v1469
      %1471 = vmatprep.subr.mxu0 0.0
      %1472 = vmatpush1.msra.mxu0 0.0
      %1473 = vmatprep.subr.mxu0 0.0
      %1474 = vmatpush1.msra.mxu0 0.0
      %1475 = vmatprep.subr.mxu0 0.0
      %1476 = vmatpush1.msra.mxu0 0.0
      %1477 = vmatprep.subr.mxu0 0.0
      %1478 = vmatpush1.msra.mxu0 0.0
      %1479 = vmatprep.subr.mxu0 0.0
      %1480 = vmatpush1.msra.mxu0 0.0
      %1481 = vmatprep.subr.mxu0 0.0
      %1482 = vmatpush1.msra.mxu0 0.0
      %1483 = vmatprep.subr.mxu0 0.0
      %1484 = vmatpush1.msra.mxu0 0.0
      %1485 = vmatprep.subr.mxu0 0.0
      %1486 = vmatpush1.msra.mxu0 0.0
      %1487 = vmatprep.subr.mxu0 0.0
      %1488 = vmatpush1.msra.mxu0 0.0
      %1489 = vmatprep.subr.mxu0 0.0
      %1490 = vmatpush1.msra.mxu0 0.0
      %1491 = vmatprep.subr.mxu0 0.0
      %1492 = vmatpush1.msra.mxu0 0.0
      %1493 = vmatprep.subr.mxu0 0.0
      %1494 = vmatpush1.msra.mxu0 0.0
      %1495 = vmatprep.subr.mxu0 0.0
      %1496 = vmatpush1.msra.mxu0 0.0
      %1497 = vmatprep.subr.mxu0 0.0
      %1498 = vmatpush1.msra.mxu0 0.0
      %1499 = vmatprep.subr.mxu0 0.0
      %1500 = vmatpush1.msra.mxu0 0.0
      %1501 = vmatprep.subr.mxu0 0.0
      %1502 = vmatpush1.msra.mxu0 0.0
      %1503 = vmatprep.subr.mxu0 0.0
      %1504 = vmatpush1.msra.mxu0 0.0
      %1505 = vmatprep.subr.mxu0 0.0
      %1506 = vmatpush1.msra.mxu0 0.0
      %1507 = vmatprep.subr.mxu0 0.0
      %1508 = vmatpush1.msra.mxu0 0.0
      %1509 = vmatprep.subr.mxu0 0.0
      %1510 = vmatpush1.msra.mxu0 0.0
      %1511 = vmatprep.subr.mxu0 0.0
      %1512 = vmatpush1.msra.mxu0 0.0
      %1513 = vmatprep.subr.mxu0 0.0
      %1514 = vmatpush1.msra.mxu0 0.0
      %1515 = vmatprep.subr.mxu0 0.0
      %1516 = vmatpush1.msra.mxu0 0.0
      %1517 = vmatprep.subr.mxu0 0.0
      %1518 = vmatpush1.msra.mxu0 0.0
      %1519 = vmatprep.subr.mxu0 0.0
      %1520 = vmatpush1.msra.mxu0 0.0
      %1521 = vmatprep.subr.mxu0 0.0
      %1522 = vmatpush1.msra.mxu0 0.0
      %1523 = vmatprep.subr.mxu0 0.0
      %1524 = vmatpush1.msra.mxu0 0.0
      %1525 = vmatprep.subr.mxu0 0.0
      %1526 = vmatpush1.msra.mxu0 0.0
      %1527 = vmatprep.subr.mxu0 0.0
      %1528 = vmatpush1.msra.mxu0 0.0
      %1529 = vmatprep.subr.mxu0 0.0
      %1530 = vmatpush1.msra.mxu0 0.0
      %1531 = vmatprep.mubr.f32.mxu0 0.0
      %v1532 = vand.u32 %v246, 4294901760
      %1533 = vmatmul.mubr.f32.gmra.mrb[0].mxu0 %v1532
      %v1534 = vpop.f32.mrb[0].mxu0
      %v1535 = vadd.f32 %v1432, %v1534
      %v1536 = vpop.f32.mrb[0].mxu0
      %v1537 = vadd.f32 %v1434, %v1536
      %1538 = vmatprep.mubr.f32.mxu0 0.0
      %v1539 = vand.u32 %v249, 4294901760
      %1540 = vmatmul.mubr.f32.gmra.mrb[0].mxu0 %v1539
      %v1541 = vpop.f32.mrb[0].mxu0
      %v1542 = vadd.f32 %v1443, %v1541
      %v1543 = vpop.f32.mrb[0].mxu0
      %v1544 = vadd.f32 %v1445, %v1543
      %1545 = vdwg.mxu0
      %v1546 = vand.u32 %v215, 4294901760
      %v1547 = vsub.f32 %v215, %v1546
      %1548 = vmatprep.subr.mxu0 %v1547
      %v1549 = vand.u32 %v214, 4294901760
      %v1550 = vsub.f32 %v214, %v1549
      %1551 = vmatpush1.msra.mxu0 %v1550
      %v1552 = vand.u32 %v268, 4294901760
      %v1553 = vsub.f32 %v268, %v1552
      %1554 = vmatprep.subr.mxu0 %v1553
      %v1555 = vand.u32 %v265, 4294901760
      %v1556 = vsub.f32 %v265, %v1555
      %1557 = vmatpush1.msra.mxu0 %v1556
      %1558 = vmatprep.subr.mxu0 0.0
      %1559 = vmatpush1.msra.mxu0 0.0
      %1560 = vmatprep.subr.mxu0 0.0
      %1561 = vmatpush1.msra.mxu0 0.0
      %1562 = vmatprep.subr.mxu0 0.0
      %1563 = vmatpush1.msra.mxu0 0.0
      %1564 = vmatprep.subr.mxu0 0.0
      %1565 = vmatpush1.msra.mxu0 0.0
      %1566 = vmatprep.subr.mxu0 0.0
      %1567 = vmatpush1.msra.mxu0 0.0
      %1568 = vmatprep.subr.mxu0 0.0
      %1569 = vmatpush1.msra.mxu0 0.0
      %1570 = vmatprep.subr.mxu0 0.0
      %1571 = vmatpush1.msra.mxu0 0.0
      %1572 = vmatprep.subr.mxu0 0.0
      %1573 = vmatpush1.msra.mxu0 0.0
      %1574 = vmatprep.subr.mxu0 0.0
      %1575 = vmatpush1.msra.mxu0 0.0
      %1576 = vmatprep.subr.mxu0 0.0
      %1577 = vmatpush1.msra.mxu0 0.0
      %1578 = vmatprep.subr.mxu0 0.0
      %1579 = vmatpush1.msra.mxu0 0.0
      %1580 = vmatprep.subr.mxu0 0.0
      %1581 = vmatpush1.msra.mxu0 0.0
      %1582 = vmatprep.subr.mxu0 0.0
      %1583 = vmatpush1.msra.mxu0 0.0
      %1584 = vmatprep.subr.mxu0 0.0
      %1585 = vmatpush1.msra.mxu0 0.0
      %1586 = vmatprep.subr.mxu0 0.0
      %1587 = vmatpush1.msra.mxu0 0.0
      %1588 = vmatprep.subr.mxu0 0.0
      %1589 = vmatpush1.msra.mxu0 0.0
      %1590 = vmatprep.subr.mxu0 0.0
      %1591 = vmatpush1.msra.mxu0 0.0
      %1592 = vmatprep.subr.mxu0 0.0
      %1593 = vmatpush1.msra.mxu0 0.0
      %1594 = vmatprep.subr.mxu0 0.0
      %1595 = vmatpush1.msra.mxu0 0.0
      %1596 = vmatprep.subr.mxu0 0.0
      %1597 = vmatpush1.msra.mxu0 0.0
      %1598 = vmatprep.subr.mxu0 0.0
      %1599 = vmatpush1.msra.mxu0 0.0
      %1600 = vmatprep.subr.mxu0 0.0
      %1601 = vmatpush1.msra.mxu0 0.0
      %1602 = vmatprep.subr.mxu0 0.0
      %1603 = vmatpush1.msra.mxu0 0.0
      %1604 = vmatprep.subr.mxu0 0.0
      %1605 = vmatpush1.msra.mxu0 0.0
      %1606 = vmatprep.subr.mxu0 0.0
      %1607 = vmatpush1.msra.mxu0 0.0
      %1608 = vmatprep.subr.mxu0 0.0
      %1609 = vmatpush1.msra.mxu0 0.0
      %1610 = vmatprep.subr.mxu0 0.0
      %1611 = vmatpush1.msra.mxu0 0.0
      %1612 = vmatprep.subr.mxu0 0.0
      %1613 = vmatpush1.msra.mxu0 0.0
      %1614 = vmatprep.subr.mxu0 0.0
      %1615 = vmatpush1.msra.mxu0 0.0
      %1616 = vmatprep.subr.mxu0 0.0
      %1617 = vmatpush1.msra.mxu0 0.0
      %1618 = vmatprep.mubr.f32.mxu0 0.0
      %v1619 = vand.u32 %v246, 4294901760
      %v1620 = vsub.f32 %v246, %v1619
      %1621 = vmatmul.mubr.f32.gmra.mrb[0].mxu0 %v1620
      %v1622 = vpop.f32.mrb[0].mxu0
      %v1623 = vadd.f32 %v1535, %v1622
      %v1624 = vpop.f32.mrb[0].mxu0
      %v1625 = vadd.f32 %v1537, %v1624
      %1626 = vmatprep.mubr.f32.mxu0 0.0
      %v1627 = vand.u32 %v249, 4294901760
      %v1628 = vsub.f32 %v249, %v1627
      %1629 = vmatmul.mubr.f32.gmra.mrb[0].mxu0 %v1628
      %v1630 = vpop.f32.mrb[0].mxu0
      %v1631 = vadd.f32 %v1542, %v1630
      %v1632 = vpop.f32.mrb[0].mxu0
      %v1633 = vadd.f32 %v1544, %v1632
      %1634 = vdwg.mxu0
      %v1635 = vand.u32 %v215, 4294901760
      %1636 = vmatprep.subr.mxu0 %v1635
      %v1637 = vand.u32 %v214, 4294901760
      %1638 = vmatpush1.msra.mxu0 %v1637
      %v1639 = vand.u32 %v268, 4294901760
      %1640 = vmatprep.subr.mxu0 %v1639
      %v1641 = vand.u32 %v265, 4294901760
      %1642 = vmatpush1.msra.mxu0 %v1641
      %1643 = vmatprep.subr.mxu0 0.0
      %1644 = vmatpush1.msra.mxu0 0.0
      %1645 = vmatprep.subr.mxu0 0.0
      %1646 = vmatpush1.msra.mxu0 0.0
      %1647 = vmatprep.subr.mxu0 0.0
      %1648 = vmatpush1.msra.mxu0 0.0
      %1649 = vmatprep.subr.mxu0 0.0
      %1650 = vmatpush1.msra.mxu0 0.0
      %1651 = vmatprep.subr.mxu0 0.0
      %1652 = vmatpush1.msra.mxu0 0.0
      %1653 = vmatprep.subr.mxu0 0.0
      %1654 = vmatpush1.msra.mxu0 0.0
      %1655 = vmatprep.subr.mxu0 0.0
      %1656 = vmatpush1.msra.mxu0 0.0
      %1657 = vmatprep.subr.mxu0 0.0
      %1658 = vmatpush1.msra.mxu0 0.0
      %1659 = vmatprep.subr.mxu0 0.0
      %1660 = vmatpush1.msra.mxu0 0.0
      %1661 = vmatprep.subr.mxu0 0.0
      %1662 = vmatpush1.msra.mxu0 0.0
      %1663 = vmatprep.subr.mxu0 0.0
      %1664 = vmatpush1.msra.mxu0 0.0
      %1665 = vmatprep.subr.mxu0 0.0
      %1666 = vmatpush1.msra.mxu0 0.0
      %1667 = vmatprep.subr.mxu0 0.0
      %1668 = vmatpush1.msra.mxu0 0.0
      %1669 = vmatprep.subr.mxu0 0.0
      %1670 = vmatpush1.msra.mxu0 0.0
      %1671 = vmatprep.subr.mxu0 0.0
      %1672 = vmatpush1.msra.mxu0 0.0
      %1673 = vmatprep.subr.mxu0 0.0
      %1674 = vmatpush1.msra.mxu0 0.0
      %1675 = vmatprep.subr.mxu0 0.0
      %1676 = vmatpush1.msra.mxu0 0.0
      %1677 = vmatprep.subr.mxu0 0.0
      %1678 = vmatpush1.msra.mxu0 0.0
      %1679 = vmatprep.subr.mxu0 0.0
      %1680 = vmatpush1.msra.mxu0 0.0
      %1681 = vmatprep.subr.mxu0 0.0
      %1682 = vmatpush1.msra.mxu0 0.0
      %1683 = vmatprep.subr.mxu0 0.0
      %1684 = vmatpush1.msra.mxu0 0.0
      %1685 = vmatprep.subr.mxu0 0.0
      %1686 = vmatpush1.msra.mxu0 0.0
      %1687 = vmatprep.subr.mxu0 0.0
      %1688 = vmatpush1.msra.mxu0 0.0
      %1689 = vmatprep.subr.mxu0 0.0
      %1690 = vmatpush1.msra.mxu0 0.0
      %1691 = vmatprep.subr.mxu0 0.0
      %1692 = vmatpush1.msra.mxu0 0.0
      %1693 = vmatprep.subr.mxu0 0.0
      %1694 = vmatpush1.msra.mxu0 0.0
      %1695 = vmatprep.subr.mxu0 0.0
      %1696 = vmatpush1.msra.mxu0 0.0
      %1697 = vmatprep.subr.mxu0 0.0
      %1698 = vmatpush1.msra.mxu0 0.0
      %1699 = vmatprep.subr.mxu0 0.0
      %1700 = vmatpush1.msra.mxu0 0.0
      %1701 = vmatprep.subr.mxu0 0.0
      %1702 = vmatpush1.msra.mxu0 0.0
      %1703 = vmatprep.mubr.f32.mxu0 0.0
      %v1704 = vand.u32 %v246, 4294901760
      %v1705 = vsub.f32 %v246, %v1704
      %v1706 = vand.u32 %v1705, 4294901760
      %1707 = vmatmul.mubr.f32.gmra.mrb[0].mxu0 %v1706
      %v1708 = vpop.f32.mrb[0].mxu0
      %v1709 = vadd.f32 %v1623, %v1708
      %v1710 = vpop.f32.mrb[0].mxu0
      %v1711 = vadd.f32 %v1625, %v1710
      %1712 = vmatprep.mubr.f32.mxu0 0.0
      %v1713 = vand.u32 %v249, 4294901760
      %v1714 = vsub.f32 %v249, %v1713
      %v1715 = vand.u32 %v1714, 4294901760
      %1716 = vmatmul.mubr.f32.gmra.mrb[0].mxu0 %v1715
      %v1717 = vpop.f32.mrb[0].mxu0
      %v1718 = vadd.f32 %v1631, %v1717
      %v1719 = vpop.f32.mrb[0].mxu0
      %v1720 = vadd.f32 %v1633, %v1719
      %1721 = vdwg.mxu0
      %v1722 = vand.u32 %v215, 4294901760
      %v1723 = vsub.f32 %v215, %v1722
      %v1724 = vand.u32 %v1723, 4294901760
      %1725 = vmatprep.subr.mxu0 %v1724
      %v1726 = vand.u32 %v214, 4294901760
      %v1727 = vsub.f32 %v214, %v1726
      %v1728 = vand.u32 %v1727, 4294901760
      %1729 = vmatpush1.msra.mxu0 %v1728
      %v1730 = vand.u32 %v268, 4294901760
      %v1731 = vsub.f32 %v268, %v1730
      %v1732 = vand.u32 %v1731, 4294901760
      %1733 = vmatprep.subr.mxu0 %v1732
      %v1734 = vand.u32 %v265, 4294901760
      %v1735 = vsub.f32 %v265, %v1734
      %v1736 = vand.u32 %v1735, 4294901760
      %1737 = vmatpush1.msra.mxu0 %v1736
      %1738 = vmatprep.subr.mxu0 0.0
      %1739 = vmatpush1.msra.mxu0 0.0
      %1740 = vmatprep.subr.mxu0 0.0
      %1741 = vmatpush1.msra.mxu0 0.0
      %1742 = vmatprep.subr.mxu0 0.0
      %1743 = vmatpush1.msra.mxu0 0.0
      %1744 = vmatprep.subr.mxu0 0.0
      %1745 = vmatpush1.msra.mxu0 0.0
      %1746 = vmatprep.subr.mxu0 0.0
      %1747 = vmatpush1.msra.mxu0 0.0
      %1748 = vmatprep.subr.mxu0 0.0
      %1749 = vmatpush1.msra.mxu0 0.0
      %1750 = vmatprep.subr.mxu0 0.0
      %1751 = vmatpush1.msra.mxu0 0.0
      %1752 = vmatprep.subr.mxu0 0.0
      %1753 = vmatpush1.msra.mxu0 0.0
      %1754 = vmatprep.subr.mxu0 0.0
      %1755 = vmatpush1.msra.mxu0 0.0
      %1756 = vmatprep.subr.mxu0 0.0
      %1757 = vmatpush1.msra.mxu0 0.0
      %1758 = vmatprep.subr.mxu0 0.0
      %1759 = vmatpush1.msra.mxu0 0.0
      %1760 = vmatprep.subr.mxu0 0.0
      %1761 = vmatpush1.msra.mxu0 0.0
      %1762 = vmatprep.subr.mxu0 0.0
      %1763 = vmatpush1.msra.mxu0 0.0
      %1764 = vmatprep.subr.mxu0 0.0
      %1765 = vmatpush1.msra.mxu0 0.0
      %1766 = vmatprep.subr.mxu0 0.0
      %1767 = vmatpush1.msra.mxu0 0.0
      %1768 = vmatprep.subr.mxu0 0.0
      %1769 = vmatpush1.msra.mxu0 0.0
      %1770 = vmatprep.subr.mxu0 0.0
      %1771 = vmatpush1.msra.mxu0 0.0
      %1772 = vmatprep.subr.mxu0 0.0
      %1773 = vmatpush1.msra.mxu0 0.0
      %1774 = vmatprep.subr.mxu0 0.0
      %1775 = vmatpush1.msra.mxu0 0.0
      %1776 = vmatprep.subr.mxu0 0.0
      %1777 = vmatpush1.msra.mxu0 0.0
      %1778 = vmatprep.subr.mxu0 0.0
      %1779 = vmatpush1.msra.mxu0 0.0
      %1780 = vmatprep.subr.mxu0 0.0
      %1781 = vmatpush1.msra.mxu0 0.0
      %1782 = vmatprep.subr.mxu0 0.0
      %1783 = vmatpush1.msra.mxu0 0.0
      %1784 = vmatprep.subr.mxu0 0.0
      %1785 = vmatpush1.msra.mxu0 0.0
      %1786 = vmatprep.subr.mxu0 0.0
      %1787 = vmatpush1.msra.mxu0 0.0
      %1788 = vmatprep.subr.mxu0 0.0
      %1789 = vmatpush1.msra.mxu0 0.0
      %1790 = vmatprep.subr.mxu0 0.0
      %1791 = vmatpush1.msra.mxu0 0.0
      %1792 = vmatprep.subr.mxu0 0.0
      %1793 = vmatpush1.msra.mxu0 0.0
      %1794 = vmatprep.subr.mxu0 0.0
      %1795 = vmatpush1.msra.mxu0 0.0
      %1796 = vmatprep.subr.mxu0 0.0
      %1797 = vmatpush1.msra.mxu0 0.0
      %1798 = vmatprep.mubr.f32.mxu0 0.0
      %v1799 = vand.u32 %v246, 4294901760
      %1800 = vmatmul.mubr.f32.gmra.mrb[0].mxu0 %v1799
      %v1801 = vpop.f32.mrb[0].mxu0
      %v1802 = vadd.f32 %v1709, %v1801
      %v1803 = vpop.f32.mrb[0].mxu0
      %v1804 = vadd.f32 %v1711, %v1803
      %1805 = vmatprep.mubr.f32.mxu0 0.0
      %v1806 = vand.u32 %v249, 4294901760
      %1807 = vmatmul.mubr.f32.gmra.mrb[0].mxu0 %v1806
      %v1808 = vpop.f32.mrb[0].mxu0
      %v1809 = vadd.f32 %v1718, %v1808
      %v1810 = vpop.f32.mrb[0].mxu0
      %v1811 = vadd.f32 %v1720, %v1810
      %1812 = vdwg.mxu0
      %v1813 = vand.u32 %v215, 4294901760
      %1814 = vmatprep.subr.mxu0 %v1813
      %v1815 = vand.u32 %v214, 4294901760
      %1816 = vmatpush1.msra.mxu0 %v1815
      %v1817 = vand.u32 %v268, 4294901760
      %1818 = vmatprep.subr.mxu0 %v1817
      %v1819 = vand.u32 %v265, 4294901760
      %1820 = vmatpush1.msra.mxu0 %v1819
      %1821 = vmatprep.subr.mxu0 0.0
      %1822 = vmatpush1.msra.mxu0 0.0
      %1823 = vmatprep.subr.mxu0 0.0
      %1824 = vmatpush1.msra.mxu0 0.0
      %1825 = vmatprep.subr.mxu0 0.0
      %1826 = vmatpush1.msra.mxu0 0.0
      %1827 = vmatprep.subr.mxu0 0.0
      %1828 = vmatpush1.msra.mxu0 0.0
      %1829 = vmatprep.subr.mxu0 0.0
      %1830 = vmatpush1.msra.mxu0 0.0
      %1831 = vmatprep.subr.mxu0 0.0
      %1832 = vmatpush1.msra.mxu0 0.0
      %1833 = vmatprep.subr.mxu0 0.0
      %1834 = vmatpush1.msra.mxu0 0.0
      %1835 = vmatprep.subr.mxu0 0.0
      %1836 = vmatpush1.msra.mxu0 0.0
      %1837 = vmatprep.subr.mxu0 0.0
      %1838 = vmatpush1.msra.mxu0 0.0
      %1839 = vmatprep.subr.mxu0 0.0
      %1840 = vmatpush1.msra.mxu0 0.0
      %1841 = vmatprep.subr.mxu0 0.0
      %1842 = vmatpush1.msra.mxu0 0.0
      %1843 = vmatprep.subr.mxu0 0.0
      %1844 = vmatpush1.msra.mxu0 0.0
      %1845 = vmatprep.subr.mxu0 0.0
      %1846 = vmatpush1.msra.mxu0 0.0
      %1847 = vmatprep.subr.mxu0 0.0
      %1848 = vmatpush1.msra.mxu0 0.0
      %1849 = vmatprep.subr.mxu0 0.0
      %1850 = vmatpush1.msra.mxu0 0.0
      %1851 = vmatprep.subr.mxu0 0.0
      %1852 = vmatpush1.msra.mxu0 0.0
      %1853 = vmatprep.subr.mxu0 0.0
      %1854 = vmatpush1.msra.mxu0 0.0
      %1855 = vmatprep.subr.mxu0 0.0
      %1856 = vmatpush1.msra.mxu0 0.0
      %1857 = vmatprep.subr.mxu0 0.0
      %1858 = vmatpush1.msra.mxu0 0.0
      %1859 = vmatprep.subr.mxu0 0.0
      %1860 = vmatpush1.msra.mxu0 0.0
      %1861 = vmatprep.subr.mxu0 0.0
      %1862 = vmatpush1.msra.mxu0 0.0
      %1863 = vmatprep.subr.mxu0 0.0
      %1864 = vmatpush1.msra.mxu0 0.0
      %1865 = vmatprep.subr.mxu0 0.0
      %1866 = vmatpush1.msra.mxu0 0.0
      %1867 = vmatprep.subr.mxu0 0.0
      %1868 = vmatpush1.msra.mxu0 0.0
      %1869 = vmatprep.subr.mxu0 0.0
      %1870 = vmatpush1.msra.mxu0 0.0
      %1871 = vmatprep.subr.mxu0 0.0
      %1872 = vmatpush1.msra.mxu0 0.0
      %1873 = vmatprep.subr.mxu0 0.0
      %1874 = vmatpush1.msra.mxu0 0.0
      %1875 = vmatprep.subr.mxu0 0.0
      %1876 = vmatpush1.msra.mxu0 0.0
      %1877 = vmatprep.subr.mxu0 0.0
      %1878 = vmatpush1.msra.mxu0 0.0
      %1879 = vmatprep.subr.mxu0 0.0
      %1880 = vmatpush1.msra.mxu0 0.0
      %1881 = vmatprep.mubr.f32.mxu0 0.0
      %v1882 = vand.u32 %v246, 4294901760
      %1883 = vmatmul.mubr.f32.gmra.mrb[0].mxu0 %v1882
      %v1884 = vpop.f32.mrb[0].mxu0
      %v1885 = vadd.f32 %v1802, %v1884
      %v1886 = vpop.f32.mrb[0].mxu0
      %v1887 = vadd.f32 %v1804, %v1886
      %1888 = vmatprep.mubr.f32.mxu0 0.0
      %v1889 = vand.u32 %v249, 4294901760
      %1890 = vmatmul.mubr.f32.gmra.mrb[0].mxu0 %v1889
      %v1891 = vpop.f32.mrb[0].mxu0
      %v1892 = vadd.f32 %v1809, %v1891
      %v1893 = vpop.f32.mrb[0].mxu0
      %v1894 = vadd.f32 %v1811, %v1893
      %1895 = vdwg.mxu0
      %v1896 = vand.u32 %v217, 4294901760
      %1897 = vmatprep.subr.mxu0 %v1896
      %v1898 = vand.u32 %v216, 4294901760
      %1899 = vmatpush1.msra.mxu0 %v1898
      %v1900 = vand.u32 %v274, 4294901760
      %1901 = vmatprep.subr.mxu0 %v1900
      %v1902 = vand.u32 %v271, 4294901760
      %1903 = vmatpush1.msra.mxu0 %v1902
      %1904 = vmatprep.subr.mxu0 0.0
      %1905 = vmatpush1.msra.mxu0 0.0
      %1906 = vmatprep.subr.mxu0 0.0
      %1907 = vmatpush1.msra.mxu0 0.0
      %1908 = vmatprep.subr.mxu0 0.0
      %1909 = vmatpush1.msra.mxu0 0.0
      %1910 = vmatprep.subr.mxu0 0.0
      %1911 = vmatpush1.msra.mxu0 0.0
      %1912 = vmatprep.subr.mxu0 0.0
      %1913 = vmatpush1.msra.mxu0 0.0
      %1914 = vmatprep.subr.mxu0 0.0
      %1915 = vmatpush1.msra.mxu0 0.0
      %1916 = vmatprep.subr.mxu0 0.0
      %1917 = vmatpush1.msra.mxu0 0.0
      %1918 = vmatprep.subr.mxu0 0.0
      %1919 = vmatpush1.msra.mxu0 0.0
      %1920 = vmatprep.subr.mxu0 0.0
      %1921 = vmatpush1.msra.mxu0 0.0
      %1922 = vmatprep.subr.mxu0 0.0
      %1923 = vmatpush1.msra.mxu0 0.0
      %1924 = vmatprep.subr.mxu0 0.0
      %1925 = vmatpush1.msra.mxu0 0.0
      %1926 = vmatprep.subr.mxu0 0.0
      %1927 = vmatpush1.msra.mxu0 0.0
      %1928 = vmatprep.subr.mxu0 0.0
      %1929 = vmatpush1.msra.mxu0 0.0
      %1930 = vmatprep.subr.mxu0 0.0
      %1931 = vmatpush1.msra.mxu0 0.0
      %1932 = vmatprep.subr.mxu0 0.0
      %1933 = vmatpush1.msra.mxu0 0.0
      %1934 = vmatprep.subr.mxu0 0.0
      %1935 = vmatpush1.msra.mxu0 0.0
      %1936 = vmatprep.subr.mxu0 0.0
      %1937 = vmatpush1.msra.mxu0 0.0
      %1938 = vmatprep.subr.mxu0 0.0
      %1939 = vmatpush1.msra.mxu0 0.0
      %1940 = vmatprep.subr.mxu0 0.0
      %1941 = vmatpush1.msra.mxu0 0.0
      %1942 = vmatprep.subr.mxu0 0.0
      %1943 = vmatpush1.msra.mxu0 0.0
      %1944 = vmatprep.subr.mxu0 0.0
      %1945 = vmatpush1.msra.mxu0 0.0
      %1946 = vmatprep.subr.mxu0 0.0
      %1947 = vmatpush1.msra.mxu0 0.0
      %1948 = vmatprep.subr.mxu0 0.0
      %1949 = vmatpush1.msra.mxu0 0.0
      %1950 = vmatprep.subr.mxu0 0.0
      %1951 = vmatpush1.msra.mxu0 0.0
      %1952 = vmatprep.subr.mxu0 0.0
      %1953 = vmatpush1.msra.mxu0 0.0
      %1954 = vmatprep.subr.mxu0 0.0
      %1955 = vmatpush1.msra.mxu0 0.0
      %1956 = vmatprep.subr.mxu0 0.0
      %1957 = vmatpush1.msra.mxu0 0.0
      %1958 = vmatprep.subr.mxu0 0.0
      %1959 = vmatpush1.msra.mxu0 0.0
      %1960 = vmatprep.subr.mxu0 0.0
      %1961 = vmatpush1.msra.mxu0 0.0
      %1962 = vmatprep.subr.mxu0 0.0
      %1963 = vmatpush1.msra.mxu0 0.0
      %1964 = vmatprep.mubr.f32.mxu0 0.0
      %v1965 = vand.u32 %v246, 4294901760
      %v1966 = vsub.f32 %v246, %v1965
      %v1967 = vand.u32 %v1966, 4294901760
      %v1968 = vsub.f32 %v1966, %v1967
      %v1969 = vand.u32 %v1968, 4294901760
      %1970 = vmatmul.mubr.f32.gmra.mrb[0].mxu0 %v1969
      %v1971 = vpop.f32.mrb[0].mxu0
      %v1972 = vadd.f32 %v234, %v1971
      %v1973 = vpop.f32.mrb[0].mxu0
      %v1974 = vadd.f32 %v235, %v1973
      %1975 = vmatprep.mubr.f32.mxu0 0.0
      %v1976 = vand.u32 %v249, 4294901760
      %v1977 = vsub.f32 %v249, %v1976
      %v1978 = vand.u32 %v1977, 4294901760
      %v1979 = vsub.f32 %v1977, %v1978
      %v1980 = vand.u32 %v1979, 4294901760
      %1981 = vmatmul.mubr.f32.gmra.mrb[0].mxu0 %v1980
      %v1982 = vpop.f32.mrb[0].mxu0
      %v1983 = vadd.f32 %v242, %v1982
      %v1984 = vpop.f32.mrb[0].mxu0
      %v1985 = vadd.f32 %v243, %v1984
      %1986 = vdwg.mxu0
      %v1987 = vand.u32 %v217, 4294901760
      %v1988 = vsub.f32 %v217, %v1987
      %v1989 = vand.u32 %v1988, 4294901760
      %v1990 = vsub.f32 %v1988, %v1989
      %v1991 = vand.u32 %v1990, 4294901760
      %1992 = vmatprep.subr.mxu0 %v1991
      %v1993 = vand.u32 %v216, 4294901760
      %v1994 = vsub.f32 %v216, %v1993
      %v1995 = vand.u32 %v1994, 4294901760
      %v1996 = vsub.f32 %v1994, %v1995
      %v1997 = vand.u32 %v1996, 4294901760
      %1998 = vmatpush1.msra.mxu0 %v1997
      %v1999 = vand.u32 %v274, 4294901760
      %v2000 = vsub.f32 %v274, %v1999
      %v2001 = vand.u32 %v2000, 4294901760
      %v2002 = vsub.f32 %v2000, %v2001
      %v2003 = vand.u32 %v2002, 4294901760
      %2004 = vmatprep.subr.mxu0 %v2003
      %v2005 = vand.u32 %v271, 4294901760
      %v2006 = vsub.f32 %v271, %v2005
      %v2007 = vand.u32 %v2006, 4294901760
      %v2008 = vsub.f32 %v2006, %v2007
      %v2009 = vand.u32 %v2008, 4294901760
      %2010 = vmatpush1.msra.mxu0 %v2009
      %2011 = vmatprep.subr.mxu0 0.0
      %2012 = vmatpush1.msra.mxu0 0.0
      %2013 = vmatprep.subr.mxu0 0.0
      %2014 = vmatpush1.msra.mxu0 0.0
      %2015 = vmatprep.subr.mxu0 0.0
      %2016 = vmatpush1.msra.mxu0 0.0
      %2017 = vmatprep.subr.mxu0 0.0
      %2018 = vmatpush1.msra.mxu0 0.0
      %2019 = vmatprep.subr.mxu0 0.0
      %2020 = vmatpush1.msra.mxu0 0.0
      %2021 = vmatprep.subr.mxu0 0.0
      %2022 = vmatpush1.msra.mxu0 0.0
      %2023 = vmatprep.subr.mxu0 0.0
      %2024 = vmatpush1.msra.mxu0 0.0
      %2025 = vmatprep.subr.mxu0 0.0
      %2026 = vmatpush1.msra.mxu0 0.0
      %2027 = vmatprep.subr.mxu0 0.0
      %2028 = vmatpush1.msra.mxu0 0.0
      %2029 = vmatprep.subr.mxu0 0.0
      %2030 = vmatpush1.msra.mxu0 0.0
      %2031 = vmatprep.subr.mxu0 0.0
      %2032 = vmatpush1.msra.mxu0 0.0
      %2033 = vmatprep.subr.mxu0 0.0
      %2034 = vmatpush1.msra.mxu0 0.0
      %2035 = vmatprep.subr.mxu0 0.0
      %2036 = vmatpush1.msra.mxu0 0.0
      %2037 = vmatprep.subr.mxu0 0.0
      %2038 = vmatpush1.msra.mxu0 0.0
      %2039 = vmatprep.subr.mxu0 0.0
      %2040 = vmatpush1.msra.mxu0 0.0
      %2041 = vmatprep.subr.mxu0 0.0
      %2042 = vmatpush1.msra.mxu0 0.0
      %2043 = vmatprep.subr.mxu0 0.0
      %2044 = vmatpush1.msra.mxu0 0.0
      %2045 = vmatprep.subr.mxu0 0.0
      %2046 = vmatpush1.msra.mxu0 0.0
      %2047 = vmatprep.subr.mxu0 0.0
      %2048 = vmatpush1.msra.mxu0 0.0
      %2049 = vmatprep.subr.mxu0 0.0
      %2050 = vmatpush1.msra.mxu0 0.0
      %2051 = vmatprep.subr.mxu0 0.0
      %2052 = vmatpush1.msra.mxu0 0.0
      %2053 = vmatprep.subr.mxu0 0.0
      %2054 = vmatpush1.msra.mxu0 0.0
      %2055 = vmatprep.subr.mxu0 0.0
      %2056 = vmatpush1.msra.mxu0 0.0
      %2057 = vmatprep.subr.mxu0 0.0
      %2058 = vmatpush1.msra.mxu0 0.0
      %2059 = vmatprep.subr.mxu0 0.0
      %2060 = vmatpush1.msra.mxu0 0.0
      %2061 = vmatprep.subr.mxu0 0.0
      %2062 = vmatpush1.msra.mxu0 0.0
      %2063 = vmatprep.subr.mxu0 0.0
      %2064 = vmatpush1.msra.mxu0 0.0
      %2065 = vmatprep.subr.mxu0 0.0
      %2066 = vmatpush1.msra.mxu0 0.0
      %2067 = vmatprep.subr.mxu0 0.0
      %2068 = vmatpush1.msra.mxu0 0.0
      %2069 = vmatprep.subr.mxu0 0.0
      %2070 = vmatpush1.msra.mxu0 0.0
      %2071 = vmatprep.mubr.f32.mxu0 0.0
      %v2072 = vand.u32 %v246, 4294901760
      %2073 = vmatmul.mubr.f32.gmra.mrb[0].mxu0 %v2072
      %v2074 = vpop.f32.mrb[0].mxu0
      %v2075 = vadd.f32 %v1972, %v2074
      %v2076 = vpop.f32.mrb[0].mxu0
      %v2077 = vadd.f32 %v1974, %v2076
      %2078 = vmatprep.mubr.f32.mxu0 0.0
      %v2079 = vand.u32 %v249, 4294901760
      %2080 = vmatmul.mubr.f32.gmra.mrb[0].mxu0 %v2079
      %v2081 = vpop.f32.mrb[0].mxu0
      %v2082 = vadd.f32 %v1983, %v2081
      %v2083 = vpop.f32.mrb[0].mxu0
      %v2084 = vadd.f32 %v1985, %v2083
      %2085 = vdwg.mxu0
      %v2086 = vand.u32 %v217, 4294901760
      %v2087 = vsub.f32 %v217, %v2086
      %2088 = vmatprep.subr.mxu0 %v2087
      %v2089 = vand.u32 %v216, 4294901760
      %v2090 = vsub.f32 %v216, %v2089
      %2091 = vmatpush1.msra.mxu0 %v2090
      %v2092 = vand.u32 %v274, 4294901760
      %v2093 = vsub.f32 %v274, %v2092
      %2094 = vmatprep.subr.mxu0 %v2093
      %v2095 = vand.u32 %v271, 4294901760
      %v2096 = vsub.f32 %v271, %v2095
      %2097 = vmatpush1.msra.mxu0 %v2096
      %2098 = vmatprep.subr.mxu0 0.0
      %2099 = vmatpush1.msra.mxu0 0.0
      %2100 = vmatprep.subr.mxu0 0.0
      %2101 = vmatpush1.msra.mxu0 0.0
      %2102 = vmatprep.subr.mxu0 0.0
      %2103 = vmatpush1.msra.mxu0 0.0
      %2104 = vmatprep.subr.mxu0 0.0
      %2105 = vmatpush1.msra.mxu0 0.0
      %2106 = vmatprep.subr.mxu0 0.0
      %2107 = vmatpush1.msra.mxu0 0.0
      %2108 = vmatprep.subr.mxu0 0.0
      %2109 = vmatpush1.msra.mxu0 0.0
      %2110 = vmatprep.subr.mxu0 0.0
      %2111 = vmatpush1.msra.mxu0 0.0
      %2112 = vmatprep.subr.mxu0 0.0
      %2113 = vmatpush1.msra.mxu0 0.0
      %2114 = vmatprep.subr.mxu0 0.0
      %2115 = vmatpush1.msra.mxu0 0.0
      %2116 = vmatprep.subr.mxu0 0.0
      %2117 = vmatpush1.msra.mxu0 0.0
      %2118 = vmatprep.subr.mxu0 0.0
      %2119 = vmatpush1.msra.mxu0 0.0
      %2120 = vmatprep.subr.mxu0 0.0
      %2121 = vmatpush1.msra.mxu0 0.0
      %2122 = vmatprep.subr.mxu0 0.0
      %2123 = vmatpush1.msra.mxu0 0.0
      %2124 = vmatprep.subr.mxu0 0.0
      %2125 = vmatpush1.msra.mxu0 0.0
      %2126 = vmatprep.subr.mxu0 0.0
      %2127 = vmatpush1.msra.mxu0 0.0
      %2128 = vmatprep.subr.mxu0 0.0
      %2129 = vmatpush1.msra.mxu0 0.0
      %2130 = vmatprep.subr.mxu0 0.0
      %2131 = vmatpush1.msra.mxu0 0.0
      %2132 = vmatprep.subr.mxu0 0.0
      %2133 = vmatpush1.msra.mxu0 0.0
      %2134 = vmatprep.subr.mxu0 0.0
      %2135 = vmatpush1.msra.mxu0 0.0
      %2136 = vmatprep.subr.mxu0 0.0
      %2137 = vmatpush1.msra.mxu0 0.0
      %2138 = vmatprep.subr.mxu0 0.0
      %2139 = vmatpush1.msra.mxu0 0.0
      %2140 = vmatprep.subr.mxu0 0.0
      %2141 = vmatpush1.msra.mxu0 0.0
      %2142 = vmatprep.subr.mxu0 0.0
      %2143 = vmatpush1.msra.mxu0 0.0
      %2144 = vmatprep.subr.mxu0 0.0
      %2145 = vmatpush1.msra.mxu0 0.0
      %2146 = vmatprep.subr.mxu0 0.0
      %2147 = vmatpush1.msra.mxu0 0.0
      %2148 = vmatprep.subr.mxu0 0.0
      %2149 = vmatpush1.msra.mxu0 0.0
      %2150 = vmatprep.subr.mxu0 0.0
      %2151 = vmatpush1.msra.mxu0 0.0
      %2152 = vmatprep.subr.mxu0 0.0
      %2153 = vmatpush1.msra.mxu0 0.0
      %2154 = vmatprep.subr.mxu0 0.0
      %2155 = vmatpush1.msra.mxu0 0.0
      %2156 = vmatprep.subr.mxu0 0.0
      %2157 = vmatpush1.msra.mxu0 0.0
      %2158 = vmatprep.mubr.f32.mxu0 0.0
      %v2159 = vand.u32 %v246, 4294901760
      %v2160 = vsub.f32 %v246, %v2159
      %2161 = vmatmul.mubr.f32.gmra.mrb[0].mxu0 %v2160
      %v2162 = vpop.f32.mrb[0].mxu0
      %v2163 = vadd.f32 %v2075, %v2162
      %v2164 = vpop.f32.mrb[0].mxu0
      %v2165 = vadd.f32 %v2077, %v2164
      %2166 = vmatprep.mubr.f32.mxu0 0.0
      %v2167 = vand.u32 %v249, 4294901760
      %v2168 = vsub.f32 %v249, %v2167
      %2169 = vmatmul.mubr.f32.gmra.mrb[0].mxu0 %v2168
      %v2170 = vpop.f32.mrb[0].mxu0
      %v2171 = vadd.f32 %v2082, %v2170
      %v2172 = vpop.f32.mrb[0].mxu0
      %v2173 = vadd.f32 %v2084, %v2172
      %2174 = vdwg.mxu0
      %v2175 = vand.u32 %v217, 4294901760
      %2176 = vmatprep.subr.mxu0 %v2175
      %v2177 = vand.u32 %v216, 4294901760
      %2178 = vmatpush1.msra.mxu0 %v2177
      %v2179 = vand.u32 %v274, 4294901760
      %2180 = vmatprep.subr.mxu0 %v2179
      %v2181 = vand.u32 %v271, 4294901760
      %2182 = vmatpush1.msra.mxu0 %v2181
      %2183 = vmatprep.subr.mxu0 0.0
      %2184 = vmatpush1.msra.mxu0 0.0
      %2185 = vmatprep.subr.mxu0 0.0
      %2186 = vmatpush1.msra.mxu0 0.0
      %2187 = vmatprep.subr.mxu0 0.0
      %2188 = vmatpush1.msra.mxu0 0.0
      %2189 = vmatprep.subr.mxu0 0.0
      %2190 = vmatpush1.msra.mxu0 0.0
      %2191 = vmatprep.subr.mxu0 0.0
      %2192 = vmatpush1.msra.mxu0 0.0
      %2193 = vmatprep.subr.mxu0 0.0
      %2194 = vmatpush1.msra.mxu0 0.0
      %2195 = vmatprep.subr.mxu0 0.0
      %2196 = vmatpush1.msra.mxu0 0.0
      %2197 = vmatprep.subr.mxu0 0.0
      %2198 = vmatpush1.msra.mxu0 0.0
      %2199 = vmatprep.subr.mxu0 0.0
      %2200 = vmatpush1.msra.mxu0 0.0
      %2201 = vmatprep.subr.mxu0 0.0
      %2202 = vmatpush1.msra.mxu0 0.0
      %2203 = vmatprep.subr.mxu0 0.0
      %2204 = vmatpush1.msra.mxu0 0.0
      %2205 = vmatprep.subr.mxu0 0.0
      %2206 = vmatpush1.msra.mxu0 0.0
      %2207 = vmatprep.subr.mxu0 0.0
      %2208 = vmatpush1.msra.mxu0 0.0
      %2209 = vmatprep.subr.mxu0 0.0
      %2210 = vmatpush1.msra.mxu0 0.0
      %2211 = vmatprep.subr.mxu0 0.0
      %2212 = vmatpush1.msra.mxu0 0.0
      %2213 = vmatprep.subr.mxu0 0.0
      %2214 = vmatpush1.msra.mxu0 0.0
      %2215 = vmatprep.subr.mxu0 0.0
      %2216 = vmatpush1.msra.mxu0 0.0
      %2217 = vmatprep.subr.mxu0 0.0
      %2218 = vmatpush1.msra.mxu0 0.0
      %2219 = vmatprep.subr.mxu0 0.0
      %2220 = vmatpush1.msra.mxu0 0.0
      %2221 = vmatprep.subr.mxu0 0.0
      %2222 = vmatpush1.msra.mxu0 0.0
      %2223 = vmatprep.subr.mxu0 0.0
      %2224 = vmatpush1.msra.mxu0 0.0
      %2225 = vmatprep.subr.mxu0 0.0
      %2226 = vmatpush1.msra.mxu0 0.0
      %2227 = vmatprep.subr.mxu0 0.0
      %2228 = vmatpush1.msra.mxu0 0.0
      %2229 = vmatprep.subr.mxu0 0.0
      %2230 = vmatpush1.msra.mxu0 0.0
      %2231 = vmatprep.subr.mxu0 0.0
      %2232 = vmatpush1.msra.mxu0 0.0
      %2233 = vmatprep.subr.mxu0 0.0
      %2234 = vmatpush1.msra.mxu0 0.0
      %2235 = vmatprep.subr.mxu0 0.0
      %2236 = vmatpush1.msra.mxu0 0.0
      %2237 = vmatprep.subr.mxu0 0.0
      %2238 = vmatpush1.msra.mxu0 0.0
      %2239 = vmatprep.subr.mxu0 0.0
      %2240 = vmatpush1.msra.mxu0 0.0
      %2241 = vmatprep.subr.mxu0 0.0
      %2242 = vmatpush1.msra.mxu0 0.0
      %2243 = vmatprep.mubr.f32.mxu0 0.0
      %v2244 = vand.u32 %v246, 4294901760
      %v2245 = vsub.f32 %v246, %v2244
      %v2246 = vand.u32 %v2245, 4294901760
      %2247 = vmatmul.mubr.f32.gmra.mrb[0].mxu0 %v2246
      %v2248 = vpop.f32.mrb[0].mxu0
      %v2249 = vadd.f32 %v2163, %v2248
      %v2250 = vpop.f32.mrb[0].mxu0
      %v2251 = vadd.f32 %v2165, %v2250
      %2252 = vmatprep.mubr.f32.mxu0 0.0
      %v2253 = vand.u32 %v249, 4294901760
      %v2254 = vsub.f32 %v249, %v2253
      %v2255 = vand.u32 %v2254, 4294901760
      %2256 = vmatmul.mubr.f32.gmra.mrb[0].mxu0 %v2255
      %v2257 = vpop.f32.mrb[0].mxu0
      %v2258 = vadd.f32 %v2171, %v2257
      %v2259 = vpop.f32.mrb[0].mxu0
      %v2260 = vadd.f32 %v2173, %v2259
      %2261 = vdwg.mxu0
      %v2262 = vand.u32 %v217, 4294901760
      %v2263 = vsub.f32 %v217, %v2262
      %v2264 = vand.u32 %v2263, 4294901760
      %2265 = vmatprep.subr.mxu0 %v2264
      %v2266 = vand.u32 %v216, 4294901760
      %v2267 = vsub.f32 %v216, %v2266
      %v2268 = vand.u32 %v2267, 4294901760
      %2269 = vmatpush1.msra.mxu0 %v2268
      %v2270 = vand.u32 %v274, 4294901760
      %v2271 = vsub.f32 %v274, %v2270
      %v2272 = vand.u32 %v2271, 4294901760
      %2273 = vmatprep.subr.mxu0 %v2272
      %v2274 = vand.u32 %v271, 4294901760
      %v2275 = vsub.f32 %v271, %v2274
      %v2276 = vand.u32 %v2275, 4294901760
      %2277 = vmatpush1.msra.mxu0 %v2276
      %2278 = vmatprep.subr.mxu0 0.0
      %2279 = vmatpush1.msra.mxu0 0.0
      %2280 = vmatprep.subr.mxu0 0.0
      %2281 = vmatpush1.msra.mxu0 0.0
      %2282 = vmatprep.subr.mxu0 0.0
      %2283 = vmatpush1.msra.mxu0 0.0
      %2284 = vmatprep.subr.mxu0 0.0
      %2285 = vmatpush1.msra.mxu0 0.0
      %2286 = vmatprep.subr.mxu0 0.0
      %2287 = vmatpush1.msra.mxu0 0.0
      %2288 = vmatprep.subr.mxu0 0.0
      %2289 = vmatpush1.msra.mxu0 0.0
      %2290 = vmatprep.subr.mxu0 0.0
      %2291 = vmatpush1.msra.mxu0 0.0
      %2292 = vmatprep.subr.mxu0 0.0
      %2293 = vmatpush1.msra.mxu0 0.0
      %2294 = vmatprep.subr.mxu0 0.0
      %2295 = vmatpush1.msra.mxu0 0.0
      %2296 = vmatprep.subr.mxu0 0.0
      %2297 = vmatpush1.msra.mxu0 0.0
      %2298 = vmatprep.subr.mxu0 0.0
      %2299 = vmatpush1.msra.mxu0 0.0
      %2300 = vmatprep.subr.mxu0 0.0
      %2301 = vmatpush1.msra.mxu0 0.0
      %2302 = vmatprep.subr.mxu0 0.0
      %2303 = vmatpush1.msra.mxu0 0.0
      %2304 = vmatprep.subr.mxu0 0.0
      %2305 = vmatpush1.msra.mxu0 0.0
      %2306 = vmatprep.subr.mxu0 0.0
      %2307 = vmatpush1.msra.mxu0 0.0
      %2308 = vmatprep.subr.mxu0 0.0
      %2309 = vmatpush1.msra.mxu0 0.0
      %2310 = vmatprep.subr.mxu0 0.0
      %2311 = vmatpush1.msra.mxu0 0.0
      %2312 = vmatprep.subr.mxu0 0.0
      %2313 = vmatpush1.msra.mxu0 0.0
      %2314 = vmatprep.subr.mxu0 0.0
      %2315 = vmatpush1.msra.mxu0 0.0
      %2316 = vmatprep.subr.mxu0 0.0
      %2317 = vmatpush1.msra.mxu0 0.0
      %2318 = vmatprep.subr.mxu0 0.0
      %2319 = vmatpush1.msra.mxu0 0.0
      %2320 = vmatprep.subr.mxu0 0.0
      %2321 = vmatpush1.msra.mxu0 0.0
      %2322 = vmatprep.subr.mxu0 0.0
      %2323 = vmatpush1.msra.mxu0 0.0
      %2324 = vmatprep.subr.mxu0 0.0
      %2325 = vmatpush1.msra.mxu0 0.0
      %2326 = vmatprep.subr.mxu0 0.0
      %2327 = vmatpush1.msra.mxu0 0.0
      %2328 = vmatprep.subr.mxu0 0.0
      %2329 = vmatpush1.msra.mxu0 0.0
      %2330 = vmatprep.subr.mxu0 0.0
      %2331 = vmatpush1.msra.mxu0 0.0
      %2332 = vmatprep.subr.mxu0 0.0
      %2333 = vmatpush1.msra.mxu0 0.0
      %2334 = vmatprep.subr.mxu0 0.0
      %2335 = vmatpush1.msra.mxu0 0.0
      %2336 = vmatprep.subr.mxu0 0.0
      %2337 = vmatpush1.msra.mxu0 0.0
      %2338 = vmatprep.mubr.f32.mxu0 0.0
      %v2339 = vand.u32 %v246, 4294901760
      %2340 = vmatmul.mubr.f32.gmra.mrb[0].mxu0 %v2339
      %v2341 = vpop.f32.mrb[0].mxu0
      %v2342 = vadd.f32 %v2249, %v2341
      %v2343 = vpop.f32.mrb[0].mxu0
      %v2344 = vadd.f32 %v2251, %v2343
      %2345 = vmatprep.mubr.f32.mxu0 0.0
      %v2346 = vand.u32 %v249, 4294901760
      %2347 = vmatmul.mubr.f32.gmra.mrb[0].mxu0 %v2346
      %v2348 = vpop.f32.mrb[0].mxu0
      %v2349 = vadd.f32 %v2258, %v2348
      %v2350 = vpop.f32.mrb[0].mxu0
      %v2351 = vadd.f32 %v2260, %v2350
      %2352 = vdwg.mxu0
      %v2353 = vand.u32 %v217, 4294901760
      %2354 = vmatprep.subr.mxu0 %v2353
      %v2355 = vand.u32 %v216, 4294901760
      %2356 = vmatpush1.msra.mxu0 %v2355
      %v2357 = vand.u32 %v274, 4294901760
      %2358 = vmatprep.subr.mxu0 %v2357
      %v2359 = vand.u32 %v271, 4294901760
      %2360 = vmatpush1.msra.mxu0 %v2359
      %2361 = vmatprep.subr.mxu0 0.0
      %2362 = vmatpush1.msra.mxu0 0.0
      %2363 = vmatprep.subr.mxu0 0.0
      %2364 = vmatpush1.msra.mxu0 0.0
      %2365 = vmatprep.subr.mxu0 0.0
      %2366 = vmatpush1.msra.mxu0 0.0
      %2367 = vmatprep.subr.mxu0 0.0
      %2368 = vmatpush1.msra.mxu0 0.0
      %2369 = vmatprep.subr.mxu0 0.0
      %2370 = vmatpush1.msra.mxu0 0.0
      %2371 = vmatprep.subr.mxu0 0.0
      %2372 = vmatpush1.msra.mxu0 0.0
      %2373 = vmatprep.subr.mxu0 0.0
      %2374 = vmatpush1.msra.mxu0 0.0
      %2375 = vmatprep.subr.mxu0 0.0
      %2376 = vmatpush1.msra.mxu0 0.0
      %2377 = vmatprep.subr.mxu0 0.0
      %2378 = vmatpush1.msra.mxu0 0.0
      %2379 = vmatprep.subr.mxu0 0.0
      %2380 = vmatpush1.msra.mxu0 0.0
      %2381 = vmatprep.subr.mxu0 0.0
      %2382 = vmatpush1.msra.mxu0 0.0
      %2383 = vmatprep.subr.mxu0 0.0
      %2384 = vmatpush1.msra.mxu0 0.0
      %2385 = vmatprep.subr.mxu0 0.0
      %2386 = vmatpush1.msra.mxu0 0.0
      %2387 = vmatprep.subr.mxu0 0.0
      %2388 = vmatpush1.msra.mxu0 0.0
      %2389 = vmatprep.subr.mxu0 0.0
      %2390 = vmatpush1.msra.mxu0 0.0
      %2391 = vmatprep.subr.mxu0 0.0
      %2392 = vmatpush1.msra.mxu0 0.0
      %2393 = vmatprep.subr.mxu0 0.0
      %2394 = vmatpush1.msra.mxu0 0.0
      %2395 = vmatprep.subr.mxu0 0.0
      %2396 = vmatpush1.msra.mxu0 0.0
      %2397 = vmatprep.subr.mxu0 0.0
      %2398 = vmatpush1.msra.mxu0 0.0
      %2399 = vmatprep.subr.mxu0 0.0
      %2400 = vmatpush1.msra.mxu0 0.0
      %2401 = vmatprep.subr.mxu0 0.0
      %2402 = vmatpush1.msra.mxu0 0.0
      %2403 = vmatprep.subr.mxu0 0.0
      %2404 = vmatpush1.msra.mxu0 0.0
      %2405 = vmatprep.subr.mxu0 0.0
      %2406 = vmatpush1.msra.mxu0 0.0
      %2407 = vmatprep.subr.mxu0 0.0
      %2408 = vmatpush1.msra.mxu0 0.0
      %2409 = vmatprep.subr.mxu0 0.0
      %2410 = vmatpush1.msra.mxu0 0.0
      %2411 = vmatprep.subr.mxu0 0.0
      %2412 = vmatpush1.msra.mxu0 0.0
      %2413 = vmatprep.subr.mxu0 0.0
      %2414 = vmatpush1.msra.mxu0 0.0
      %2415 = vmatprep.subr.mxu0 0.0
      %2416 = vmatpush1.msra.mxu0 0.0
      %2417 = vmatprep.subr.mxu0 0.0
      %2418 = vmatpush1.msra.mxu0 0.0
      %2419 = vmatprep.subr.mxu0 0.0
      %2420 = vmatpush1.msra.mxu0 0.0
      %2421 = vmatprep.mubr.f32.mxu0 0.0
      %v2422 = vand.u32 %v246, 4294901760
      %2423 = vmatmul.mubr.f32.gmra.mrb[0].mxu0 %v2422
      %v2424 = vpop.f32.mrb[0].mxu0
      %v2425 = vadd.f32 %v2342, %v2424
      %v2426 = vpop.f32.mrb[0].mxu0
      %v2427 = vadd.f32 %v2344, %v2426
      %2428 = vmatprep.mubr.f32.mxu0 0.0
      %v2429 = vand.u32 %v249, 4294901760
      %2430 = vmatmul.mubr.f32.gmra.mrb[0].mxu0 %v2429
      %v2431 = vpop.f32.mrb[0].mxu0
      %v2432 = vadd.f32 %v2349, %v2431
      %v2433 = vpop.f32.mrb[0].mxu0
      %v2434 = vadd.f32 %v2351, %v2433
      %2435 = vdwg.mxu0
      %2436 = vst [vmem:[%s208] sm:$0xff] %v805
      %2437 = vst [vmem:[%s208 + $0x8] sm:$0xff] %v807
      %2438 = vst [vmem:[%s208 + $0x10] sm:$0xff] %v1345
      %2439 = vst [vmem:[%s208 + $0x18] sm:$0xff] %v1347
      %2440 = vst [vmem:[%s208 + $0x20] sm:$0xff] %v1885
      %2441 = vst [vmem:[%s208 + $0x28] sm:$0xff] %v1887
      %2442 = vst [vmem:[%s208 + $0x30] sm:$0xff] %v2425
      %2443 = vst [vmem:[%s208 + $0x38] sm:$0xff] %v2427
      %2444 = vst [vmem:[%s208 + $0x40] sm:$0xf] %v812
      %2445 = vst [vmem:[%s208 + $0x48] sm:$0xf] %v814
      %2446 = vst [vmem:[%s208 + $0x50] sm:$0xf] %v1352
      %2447 = vst [vmem:[%s208 + $0x58] sm:$0xf] %v1354
      %2448 = vst [vmem:[%s208 + $0x60] sm:$0xf] %v1892
      %2449 = vst [vmem:[%s208 + $0x68] sm:$0xf] %v1894
      %2450 = vst [vmem:[%s208 + $0x70] sm:$0xf] %v2432
      %2451 = vst [vmem:[%s208 + $0x78] sm:$0xf] %v2434
      %s2452 = smul.u32 8, %s19
      %p2453 = scmp.lt.s32.totalorder %s18, 1
      %s2454 = scalar_select %p2453, %s18, 1
      %p2455 = scmp.lt.s32.totalorder %s2452, 7
      %s2456 = scalar_select %p2455, %s2452, 7
      %s2457 = smul.addr %s2454, 16
      %s2458 = sadd.s32 %s2456, %s2457
      %s2459 = smul.addr %s2458, 8
      %s2460 = scalar_lea.vmem %s3, %s2459
      // Predicated region
      $region33: #{tpu_custom_call.1} parent=31 // pred_check
        %p2461 = pneg %p116
      $region34: #{tpu_custom_call.1} parent=31 // pred_check_branch
        %2463 = sbr.rel (%p2461) target = $region36
      $region35: #{tpu_custom_call.1} parent=31 // pred_region
        %s2464 = smul.u32 8, %s19
      $region36: #{tpu_custom_call.1} parent=31 // pred_fallthru
        _
    $region32: #{tpu_custom_call.1} parent=5 // pred_fallthru
      _
    %p2465 = scmp.le.s32.totalorder 2, %s9
    // Predicated region
    $region37: #{tpu_custom_call.1} parent=5 // pred_check
      %p2466 = pneg %p2465
    $region38: #{tpu_custom_call.1} parent=5 // pred_check_branch
      %2468 = sbr.rel (%p2466) target = $region40
    $region39: #{tpu_custom_call.1} parent=5 // pred_region
      %s2469 = ssub.s32 %s9, 2
      // Predicated region
      $region41: #{tpu_custom_call.1} parent=39 // pred_check
        %p2470 = pneg %p122
      $region42: #{tpu_custom_call.1} parent=39 // pred_check_branch
        %2472 = sbr.rel (%p2470) target = $region44
      $region43: #{tpu_custom_call.1} parent=39 // pred_region
        %s2473 = smul.u32 8, %s21
        %p2474 = scmp.lt.s32.totalorder %s20, 1
        %s2475 = scalar_select %p2474, %s20, 1
        %p2476 = scmp.lt.s32.totalorder %s2473, 7
        %s2477 = scalar_select %p2476, %s2473, 7
        %s2478 = smul.addr %s2475, 16
        %s2479 = sadd.s32 %s2477, %s2478
        %s2480 = smul.addr %s2479, 8
        %s2481 = scalar_lea.vmem %s3, %s2480
      $region44: #{tpu_custom_call.1} parent=39 // pred_fallthru
        _
    $region40: #{tpu_custom_call.1} parent=5 // pred_fallthru
      _
  $region6: #{tpu_custom_call.1} parent=0 // loop_footer
    %s13 = sadd.s32 1, %s9
  $region7: #{tpu_custom_call.1} parent=0 // loop_footer_branch
    %8 = sbr.rel target = $region3
  $region8: #{tpu_custom_call.1} parent=0 // loop_exit
    _

</llo_original>
